<compile_context>
chip_gen: v6e
topology: v6e:2x2x1
jax: 0.10.0
libtpu: 0.0.40
codegen_flags: <defaults>
</compile_context>

<pallas_src>
import functools

import jax
import jax.numpy as jnp
from jax.experimental import pallas as pl
from jax.experimental.pallas import tpu as pltpu


_LANE = 128                       # lane-dense feature padding (keep 128: dims are tiny)
_NODE_PAD = 256                   # node-count padding (=> >= 2 row tiles of 128)
_NODE_TILE = 512                  # target node tile for the A @ X aggregation
_X_RESIDENT_BUDGET = 8 * 1024 * 1024   # bf16 X kept resident in VMEM if under this


def _round_up(x, m):
    return ((x + m - 1) // m) * m


def _pad2(a, rows, cols):
    return jnp.pad(a, ((0, rows - a.shape[0]), (0, cols - a.shape[1])))


def _pick_tile(n, target):
    """Largest multiple of 128 that divides n (n is a 128-multiple), <= target."""
    t = max(_LANE, (min(target, n) // _LANE) * _LANE)
    while t > _LANE and n % t != 0:
        t -= _LANE
    return t


# ----------------------------- Pallas kernels -----------------------------

def _gin_layer_kernel(a_ref, x_ref, w1_ref, b1_ref, w2_ref, b2_ref,
                      scale_ref, shift_ref, o_ref, acc_ref, *,
                      apply_act, x_resident, tk):
    """One (row-tile, K-tile) step of  BN(MLP(A @ X))  with optional ReLU."""
    k = pl.program_id(1)

    @pl.when(k == 0)
    def _():
        acc_ref[...] = jnp.zeros_like(acc_ref)

    # GIN 'add' aggregation (incl. self loop): accumulate A-tile @ X-tile.
    # A is int8 in HBM; upcast to bf16 in-kernel (hidden under DMA) so the
    # matmul is a bf16 MXU op with f32 accumulation.
    a = a_ref[...].astype(jnp.float32).astype(jnp.bfloat16)
    if x_resident:
        start = pl.multiple_of(k * tk, tk)
        xk = x_ref[pl.ds(start, tk), :]
    else:
        xk = x_ref[...]
    acc_ref[...] += jnp.dot(a, xk, preferred_element_type=jnp.float32)

    @pl.when(k == pl.num_programs(1) - 1)
    def _():
        agg = acc_ref[...]
        # GIN MLP: Linear(in, 2*in) -> ReLU -> Linear(2*in, out); bf16 weights,
        # f32 accumulation.
        h = jnp.dot(agg.astype(jnp.bfloat16), w1_ref[...],
                    preferred_element_type=jnp.float32) + b1_ref[...]
        h = jnp.maximum(h, 0.0)
        h = jnp.dot(h.astype(jnp.bfloat16), w2_ref[...],
                    preferred_element_type=jnp.float32) + b2_ref[...]
        # BatchNorm1d (eval): precomputed affine scale/shift.
        h = h * scale_ref[...] + shift_ref[...]
        if apply_act:
            # TODO(synk): `act` is undefined in the reference snippet; assumed ReLU.
            h = jnp.maximum(h, 0.0)
        # F.dropout(..., training=False) is the identity.
        o_ref[...] = h.astype(o_ref.dtype)


def gin_layer(adj, x, w1, b1, w2, b2, bn_scale, bn_shift, *, apply_act,
              out_dtype=jnp.float32, block=_NODE_TILE):
    """adj: (n_pad, n_pad) int8, x: (n_pad, fin_pad) bf16, weights bf16 padded."""
    n_pad = adj.shape[0]
    fin_pad = x.shape[1]
    hmlp_pad = w1.shape[1]
    fout_pad = w2.shape[1]

    # K tile as large as possible (<= 512, measured ~85% of HBM roofline);
    # row tile clamped so the 'parallel' axis has >= 2 tiles for v7x megacore.
    tk = _pick_tile(n_pad, block)
    tm = _pick_tile(n_pad, max(_LANE, min(block, n_pad // 2)))
    grid = (n_pad // tm, n_pad // tk)

    # Keep X fully resident in VMEM across the K loop when it fits; otherwise
    # stream (tk, fin_pad) slices per K step.
    x_bytes = n_pad * fin_pad * x.dtype.itemsize
    x_resident = x_bytes <= _X_RESIDENT_BUDGET
    if x_resident:
        x_spec = pl.BlockSpec((n_pad, fin_pad), lambda i, k: (0, 0))
    else:
        x_spec = pl.BlockSpec((tk, fin_pad), lambda i, k: (k, 0))

    out_itemsize = 2 if out_dtype == jnp.bfloat16 else 4
    est = (2 * tm * tk * 1                                        # A tiles (int8)
           + (2 * x_bytes if x_resident else 2 * tk * fin_pad * 2)  # X
           + 2 * (fin_pad * hmlp_pad + hmlp_pad * fout_pad) * 2   # bf16 weights
           + 2 * (hmlp_pad + 3 * fout_pad) * 4                    # bias / BN affine
           + 2 * tm * fout_pad * out_itemsize                     # output tiles
           + tm * fin_pad * 4)                                    # f32 accumulator
    vmem_limit = int(min(48 * 1024 * 1024,
                         max(16 * 1024 * 1024, est + 4 * 1024 * 1024)))

    grid_spec = pltpu.PrefetchScalarGridSpec(
        num_scalar_prefetch=0,
        grid=grid,
        in_specs=[
            pl.BlockSpec((tm, tk), lambda i, k: (i, k)),          # A (int8)
            x_spec,                                               # X (bf16)
            pl.BlockSpec((fin_pad, hmlp_pad), lambda i, k: (0, 0)),
            pl.BlockSpec((1, hmlp_pad), lambda i, k: (0, 0)),
            pl.BlockSpec((hmlp_pad, fout_pad), lambda i, k: (0, 0)),
            pl.BlockSpec((1, fout_pad), lambda i, k: (0, 0)),
            pl.BlockSpec((1, fout_pad), lambda i, k: (0, 0)),
            pl.BlockSpec((1, fout_pad), lambda i, k: (0, 0)),
        ],
        out_specs=pl.BlockSpec((tm, fout_pad), lambda i, k: (i, 0)),
        scratch_shapes=[pltpu.VMEM((tm, fin_pad), jnp.float32)],
    )

    return pl.pallas_call(
        functools.partial(_gin_layer_kernel, apply_act=apply_act,
                          x_resident=x_resident, tk=tk),
        out_shape=jax.ShapeDtypeStruct((n_pad, fout_pad), out_dtype),
        grid_spec=grid_spec,
        compiler_params=pltpu.CompilerParams(
            dimension_semantics=("parallel", "arbitrary"),
            vmem_limit_bytes=vmem_limit),
    )(adj, x, w1, b1, w2, b2, bn_scale, bn_shift)


def _decode_kernel(s_ref, d_ref, o_ref):
    # Inputs are (D, te); output is a lane-dense (1, te) tile.
    o_ref[...] = jnp.sum(s_ref[...] * d_ref[...], axis=0, keepdims=True)


def decode(src_feats, dst_feats, *, block_e=1024):
    """(src * dst).sum(-1), tiled over edge blocks with a lane-dense output."""
    e, d = src_feats.shape
    e_pad = _round_up(max(e, 1), _LANE)
    # TODO(synk): fold this transpose into the z-gather (column gather on z.T)
    # to avoid an extra HBM pass at very large E.
    s = _pad2(src_feats, e_pad, d).T          # (d, e_pad): edges on the lane axis
    t = _pad2(dst_feats, e_pad, d).T
    te = _pick_tile(e_pad, block_e)
    out = pl.pallas_call(
        _decode_kernel,
        out_shape=jax.ShapeDtypeStruct((1, e_pad), jnp.float32),
        grid_spec=pltpu.PrefetchScalarGridSpec(
            num_scalar_prefetch=0,
            grid=(e_pad // te,),
            in_specs=[pl.BlockSpec((d, te), lambda i: (0, i)),
                      pl.BlockSpec((d, te), lambda i: (0, i))],
            out_specs=pl.BlockSpec((1, te), lambda i: (0, i))),
        compiler_params=pltpu.CompilerParams(
            dimension_semantics=("parallel",),
            vmem_limit_bytes=32 * 1024 * 1024),
    )(s, t)
    return out[0, :e]


# ------------------------------- JAX glue ---------------------------------

def build_dense_adj(edge_index, num_nodes, n_pad):
    """A[dst, src] = edge multiplicity; self loops folded in (PyG add_self_loops).

    Built directly at the padded shape in int8 via a single scatter pass
    (multiplicity + self loop must stay <= 127, exact in int8).
    """
    # TODO(synk): for large sparse graphs, replace the dense O(N^2) adjacency
    # matmul with a scalar-prefetch / DMA gather aggregation scaling with E.
    # TODO(synk): on v7x, an fp8-e4m3 adjacency could feed the fp8 MXU directly.
    src, dst = edge_index[0], edge_index[1]
    loops = jnp.arange(num_nodes, dtype=edge_index.dtype)
    rows = jnp.concatenate([dst, loops])
    cols = jnp.concatenate([src, loops])
    ones = jnp.ones(rows.shape, jnp.int8)
    return jnp.zeros((n_pad, n_pad), jnp.int8).at[rows, cols].add(ones)


def init_gnn_lp_params(key, input_dim, hid_dim, out_dim, gcn_layer_num=2):
    dims = [(input_dim, hid_dim)]
    for _ in range(gcn_layer_num - 2):
        dims.append((hid_dim, hid_dim))
    dims.append((hid_dim, out_dim))

    layers = []
    bn_eps = 1e-5
    for (din, dout) in dims:
        key, k1, k2, k3, k4, k5, k6 = jax.random.split(key, 7)
        w1 = 0.1 * jax.random.normal(k1, (din, 2 * din), jnp.float32)
        b1 = 0.1 * jax.random.normal(k2, (1, 2 * din), jnp.float32)
        w2 = 0.1 * jax.random.normal(k3, (2 * din, dout), jnp.float32)
        b2 = 0.1 * jax.random.normal(k4, (1, dout), jnp.float32)
        gamma = 1.0 + 0.1 * jax.random.normal(k5, (1, dout), jnp.float32)
        beta = 0.1 * jax.random.normal(k6, (1, dout), jnp.float32)
        # eval-mode BN with running_mean=0, running_var=1
        bn_scale = gamma / jnp.sqrt(1.0 + bn_eps)
        bn_shift = beta
        layers.append(dict(w1=w1, b1=b1, w2=w2, b2=b2,
                           bn_scale=bn_scale, bn_shift=bn_shift))
    return layers


def _pad_layer_params(lp):
    """Zero-pad params to lane-dense (128-multiple) feature dims; weights bf16.

    Zero padding is numerically exact for the real (unpadded) rows/cols.
    """
    din, hmlp = lp["w1"].shape
    dout = lp["w2"].shape[1]
    din_p = _round_up(din, _LANE)
    hmlp_p = _round_up(hmlp, _LANE)
    dout_p = _round_up(dout, _LANE)
    return dict(
        w1=_pad2(lp["w1"], din_p, hmlp_p).astype(jnp.bfloat16),
        b1=_pad2(lp["b1"], 1, hmlp_p),
        w2=_pad2(lp["w2"], hmlp_p, dout_p).astype(jnp.bfloat16),
        b2=_pad2(lp["b2"], 1, dout_p),
        bn_scale=_pad2(lp["bn_scale"], 1, dout_p),
        bn_shift=_pad2(lp["bn_shift"], 1, dout_p),
    ), dout


@jax.jit
def gnn_lp_forward(layers, x, edge_index, edge_label_index):
    num_nodes, input_dim = x.shape
    n_pad = _round_up(num_nodes, _NODE_PAD)

    adj = build_dense_adj(edge_index, num_nodes, n_pad)          # int8, padded

    # Pad node features to (n_pad, 128*k); aggregation operands are bf16.
    h = _pad2(x, n_pad, _round_up(input_dim, _LANE)).astype(jnp.bfloat16)

    # TODO(synk): when A fits VMEM, fuse both GIN layers (and decode) into one
    # pallas_call so A streams from HBM once and h never round-trips.
    num_layers = len(layers)
    out_dim = None
    for i, lp in enumerate(layers):
        lp_pad, out_dim = _pad_layer_params(lp)
        last = (i == num_layers - 1)
        h = gin_layer(adj, h,
                      lp_pad["w1"], lp_pad["b1"], lp_pad["w2"], lp_pad["b2"],
                      lp_pad["bn_scale"], lp_pad["bn_shift"],
                      apply_act=not last,
                      out_dtype=jnp.float32 if last else jnp.bfloat16)

    z = h[:num_nodes, :out_dim]                                  # drop padding
    src = z[edge_label_index[0]]
    dst = z[edge_label_index[1]]
    return decode(src, dst)


# --------------------------------- main ------------------------------------

if __name__ == "__main__":
    key = jax.random.PRNGKey(0)
    k_x, k_e, k_l, k_p = jax.random.split(key, 4)

    num_nodes = 16
    input_dim = 16
    hid_dim = 32
    out_dim = 32
    num_edges = 40
    num_label_edges = 8

    x = jax.random.normal(k_x, (num_nodes, input_dim), jnp.float32)
    edge_index = jax.random.randint(k_e, (2, num_edges), 0, num_nodes, jnp.int32)
    edge_label_index = jax.random.randint(
        k_l, (2, num_label_edges), 0, num_nodes, jnp.int32)

    params = init_gnn_lp_params(k_p, input_dim, hid_dim, out_dim, gcn_layer_num=2)

    scores = gnn_lp_forward(params, x, edge_index, edge_label_index)
    jax.block_until_ready(scores)

    assert scores.shape == (num_label_edges,)
    assert jnp.all(jnp.isfinite(scores))
    print("KERNEL_OK")
</pallas_src>

<mosaic_0001>
module attributes {stable_mosaic.version = 11 : i64} {
  func.func @_gin_layer_kernel(%arg0: i32, %arg1: i32, %arg2: memref<128x256xi8, #tpu.memory_space<vmem>>, %arg3: memref<256x128xbf16, #tpu.memory_space<vmem>>, %arg4: memref<128x128xbf16, #tpu.memory_space<vmem>>, %arg5: memref<1x128xf32, #tpu.memory_space<vmem>>, %arg6: memref<128x128xbf16, #tpu.memory_space<vmem>>, %arg7: memref<1x128xf32, #tpu.memory_space<vmem>>, %arg8: memref<1x128xf32, #tpu.memory_space<vmem>>, %arg9: memref<1x128xf32, #tpu.memory_space<vmem>>, %arg10: memref<128x128xbf16, #tpu.memory_space<vmem>>, %arg11: memref<128x128xf32, #tpu.memory_space<vmem>>) attributes {dimension_semantics = [#tpu.dimension_semantics<parallel>, #tpu.dimension_semantics<arbitrary>], iteration_bounds = array<i64: 2, 1>, scalar_prefetch = 0 : i64, scratch_operands = 1 : i64, tpu.core_type = #tpu.core_type<tc>, window_params = [{transform_indices = @transform_0, window_bounds = array<i64: 128, 256>}, {pipeline_mode = #tpu.pipeline_mode<synchronous>, transform_indices = @transform_1, window_bounds = array<i64: 256, 128>}, {pipeline_mode = #tpu.pipeline_mode<synchronous>, transform_indices = @transform_2, window_bounds = array<i64: 128, 128>}, {pipeline_mode = #tpu.pipeline_mode<synchronous>, transform_indices = @transform_3, window_bounds = array<i64: 1, 128>}, {pipeline_mode = #tpu.pipeline_mode<synchronous>, transform_indices = @transform_4, window_bounds = array<i64: 128, 128>}, {pipeline_mode = #tpu.pipeline_mode<synchronous>, transform_indices = @transform_5, window_bounds = array<i64: 1, 128>}, {pipeline_mode = #tpu.pipeline_mode<synchronous>, transform_indices = @transform_6, window_bounds = array<i64: 1, 128>}, {pipeline_mode = #tpu.pipeline_mode<synchronous>, transform_indices = @transform_7, window_bounds = array<i64: 1, 128>}, {transform_indices = @transform_8, window_bounds = array<i64: 128, 128>}]} {
    %c0_i32 = arith.constant 0 : i32
    %0 = arith.cmpi eq, %arg1, %c0_i32 : i32
    %1 = arith.extui %0 : i1 to i32
    %c0_i32_0 = arith.constant 0 : i32
    %2 = arith.cmpi ne, %1, %c0_i32_0 : i32
    scf.if %2 {
      %cst_9 = arith.constant 0.000000e+00 : f32
      %17 = vector.broadcast %cst_9 : f32 to vector<128x128xf32>
      %c0_10 = arith.constant 0 : index
      %c0_11 = arith.constant 0 : index
      %18 = vector.load %arg11[%c0_10, %c0_11] : memref<128x128xf32, #tpu.memory_space<vmem>>, vector<128x128xf32>
      tpu.vector_store %arg11[%c0_10, %c0_11], %17 {strides = array<i32>} : memref<128x128xf32, #tpu.memory_space<vmem>>, vector<128x128xf32>,
    } else {
    }
    %c0 = arith.constant 0 : index
    %c0_1 = arith.constant 0 : index
    %3 = vector.load %arg2[%c0, %c0_1] : memref<128x256xi8, #tpu.memory_space<vmem>>, vector<128x256xi8>
    %4 = arith.sitofp %3 : vector<128x256xi8> to vector<128x256xf32>
    %5 = arith.truncf %4 : vector<128x256xf32> to vector<128x256xbf16>
    %c256_i32 = arith.constant 256 : i32
    %6 = arith.muli %arg1, %c256_i32 : i32
    %7 = tpu.assume_multiple %6, 256 : i32
    %8 = arith.index_cast %7 : i32 to index
    %c0_2 = arith.constant 0 : index
    %9 = vector.load %arg3[%8, %c0_2] : memref<256x128xbf16, #tpu.memory_space<vmem>>, vector<256x128xbf16>
    %c0_3 = arith.constant 0 : index
    %c0_4 = arith.constant 0 : index
    %10 = vector.load %arg11[%c0_3, %c0_4] : memref<128x128xf32, #tpu.memory_space<vmem>>, vector<128x128xf32>
    %cst = arith.constant dense<0.000000e+00> : vector<128x128xf32>
    %11 = tpu.matmul %5, %9, %cst {dimension_numbers = #tpu.dot_dimension_numbers<[1], [0], [0], [1], [0, 0, 1, 1], [], []>} : vector<128x256xbf16>, vector<256x128xbf16>, vector<128x128xf32> -> vector<128x128xf32>
    %12 = arith.addf %10, %11 : vector<128x128xf32>
    %c0_5 = arith.constant 0 : index
    %c0_6 = arith.constant 0 : index
    %13 = vector.load %arg11[%c0_5, %c0_6] : memref<128x128xf32, #tpu.memory_space<vmem>>, vector<128x128xf32>
    tpu.vector_store %arg11[%c0_5, %c0_6], %12 {strides = array<i32>} : memref<128x128xf32, #tpu.memory_space<vmem>>, vector<128x128xf32>,
    %c0_i32_7 = arith.constant 0 : i32
    %14 = arith.cmpi eq, %arg1, %c0_i32_7 : i32
    %15 = arith.extui %14 : i1 to i32
    %c0_i32_8 = arith.constant 0 : i32
    %16 = arith.cmpi ne, %15, %c0_i32_8 : i32
    scf.if %16 {
      %c0_9 = arith.constant 0 : index
      %c0_10 = arith.constant 0 : index
      %17 = vector.load %arg11[%c0_9, %c0_10] : memref<128x128xf32, #tpu.memory_space<vmem>>, vector<128x128xf32>
      %18 = arith.truncf %17 : vector<128x128xf32> to vector<128x128xbf16>
      %c0_11 = arith.constant 0 : index
      %c0_12 = arith.constant 0 : index
      %19 = vector.load %arg4[%c0_11, %c0_12] : memref<128x128xbf16, #tpu.memory_space<vmem>>, vector<128x128xbf16>
      %cst_13 = arith.constant dense<0.000000e+00> : vector<128x128xf32>
      %20 = tpu.matmul %18, %19, %cst_13 {dimension_numbers = #tpu.dot_dimension_numbers<[1], [0], [0], [1], [0, 0, 1, 1], [], []>} : vector<128x128xbf16>, vector<128x128xbf16>, vector<128x128xf32> -> vector<128x128xf32>
      %c0_14 = arith.constant 0 : index
      %c0_15 = arith.constant 0 : index
      %21 = vector.load %arg5[%c0_14, %c0_15] : memref<1x128xf32, #tpu.memory_space<vmem>>, vector<1x128xf32>
      %22 = vector.broadcast %21 : vector<1x128xf32> to vector<128x128xf32>
      %23 = arith.addf %20, %22 : vector<128x128xf32>
      %cst_16 = arith.constant 0.000000e+00 : f32
      %24 = vector.broadcast %cst_16 : f32 to vector<128x128xf32>
      %25 = arith.maximumf %23, %24 : vector<128x128xf32>
      %26 = arith.truncf %25 : vector<128x128xf32> to vector<128x128xbf16>
      %c0_17 = arith.constant 0 : index
      %c0_18 = arith.constant 0 : index
      %27 = vector.load %arg6[%c0_17, %c0_18] : memref<128x128xbf16, #tpu.memory_space<vmem>>, vector<128x128xbf16>
      %cst_19 = arith.constant dense<0.000000e+00> : vector<128x128xf32>
      %28 = tpu.matmul %26, %27, %cst_19 {dimension_numbers = #tpu.dot_dimension_numbers<[1], [0], [0], [1], [0, 0, 1, 1], [], []>} : vector<128x128xbf16>, vector<128x128xbf16>, vector<128x128xf32> -> vector<128x128xf32>
      %c0_20 = arith.constant 0 : index
      %c0_21 = arith.constant 0 : index
      %29 = vector.load %arg7[%c0_20, %c0_21] : memref<1x128xf32, #tpu.memory_space<vmem>>, vector<1x128xf32>
      %30 = vector.broadcast %29 : vector<1x128xf32> to vector<128x128xf32>
      %31 = arith.addf %28, %30 : vector<128x128xf32>
      %c0_22 = arith.constant 0 : index
      %c0_23 = arith.constant 0 : index
      %32 = vector.load %arg8[%c0_22, %c0_23] : memref<1x128xf32, #tpu.memory_space<vmem>>, vector<1x128xf32>
      %33 = vector.broadcast %32 : vector<1x128xf32> to vector<128x128xf32>
      %34 = arith.mulf %31, %33 : vector<128x128xf32>
      %c0_24 = arith.constant 0 : index
      %c0_25 = arith.constant 0 : index
      %35 = vector.load %arg9[%c0_24, %c0_25] : memref<1x128xf32, #tpu.memory_space<vmem>>, vector<1x128xf32>
      %36 = vector.broadcast %35 : vector<1x128xf32> to vector<128x128xf32>
      %37 = arith.addf %34, %36 : vector<128x128xf32>
      %cst_26 = arith.constant 0.000000e+00 : f32
      %38 = vector.broadcast %cst_26 : f32 to vector<128x128xf32>
      %39 = arith.maximumf %37, %38 : vector<128x128xf32>
      %40 = arith.truncf %39 : vector<128x128xf32> to vector<128x128xbf16>
      %c0_27 = arith.constant 0 : index
      %c0_28 = arith.constant 0 : index
      %41 = vector.load %arg10[%c0_27, %c0_28] : memref<128x128xbf16, #tpu.memory_space<vmem>>, vector<128x128xbf16>
      tpu.vector_store %arg10[%c0_27, %c0_28], %40 {strides = array<i32>} : memref<128x128xbf16, #tpu.memory_space<vmem>>, vector<128x128xbf16>,
    } else {
    }
    return
  }
  func.func @transform_0(%arg0: i32, %arg1: i32) -> (i32, i32) {
    %c0_i32 = arith.constant 0 : i32
    return %arg0, %arg1 : i32, i32
  }
  func.func @transform_1(%arg0: i32, %arg1: i32) -> (i32, i32) {
    %c0_i32 = arith.constant 0 : i32
    %c0_i32_0 = arith.constant 0 : i32
    %c0_i32_1 = arith.constant 0 : i32
    return %c0_i32, %c0_i32_0 : i32, i32
  }
  func.func @transform_2(%arg0: i32, %arg1: i32) -> (i32, i32) {
    %c0_i32 = arith.constant 0 : i32
    %c0_i32_0 = arith.constant 0 : i32
    %c0_i32_1 = arith.constant 0 : i32
    return %c0_i32, %c0_i32_0 : i32, i32
  }
  func.func @transform_3(%arg0: i32, %arg1: i32) -> (i32, i32) {
    %c0_i32 = arith.constant 0 : i32
    %c0_i32_0 = arith.constant 0 : i32
    %c0_i32_1 = arith.constant 0 : i32
    return %c0_i32, %c0_i32_0 : i32, i32
  }
  func.func @transform_4(%arg0: i32, %arg1: i32) -> (i32, i32) {
    %c0_i32 = arith.constant 0 : i32
    %c0_i32_0 = arith.constant 0 : i32
    %c0_i32_1 = arith.constant 0 : i32
    return %c0_i32, %c0_i32_0 : i32, i32
  }
  func.func @transform_5(%arg0: i32, %arg1: i32) -> (i32, i32) {
    %c0_i32 = arith.constant 0 : i32
    %c0_i32_0 = arith.constant 0 : i32
    %c0_i32_1 = arith.constant 0 : i32
    return %c0_i32, %c0_i32_0 : i32, i32
  }
  func.func @transform_6(%arg0: i32, %arg1: i32) -> (i32, i32) {
    %c0_i32 = arith.constant 0 : i32
    %c0_i32_0 = arith.constant 0 : i32
    %c0_i32_1 = arith.constant 0 : i32
    return %c0_i32, %c0_i32_0 : i32, i32
  }
  func.func @transform_7(%arg0: i32, %arg1: i32) -> (i32, i32) {
    %c0_i32 = arith.constant 0 : i32
    %c0_i32_0 = arith.constant 0 : i32
    %c0_i32_1 = arith.constant 0 : i32
    return %c0_i32, %c0_i32_0 : i32, i32
  }
  func.func @transform_8(%arg0: i32, %arg1: i32) -> (i32, i32) {
    %c0_i32 = arith.constant 0 : i32
    %c0_i32_0 = arith.constant 0 : i32
    return %arg0, %c0_i32 : i32, i32
  }
}

module attributes {stable_mosaic.version = 11 : i64} {
  func.func @_gin_layer_kernel(%arg0: i32, %arg1: i32, %arg2: memref<128x256xi8, #tpu.memory_space<vmem>>, %arg3: memref<256x128xbf16, #tpu.memory_space<vmem>>, %arg4: memref<128x128xbf16, #tpu.memory_space<vmem>>, %arg5: memref<1x128xf32, #tpu.memory_space<vmem>>, %arg6: memref<128x128xbf16, #tpu.memory_space<vmem>>, %arg7: memref<1x128xf32, #tpu.memory_space<vmem>>, %arg8: memref<1x128xf32, #tpu.memory_space<vmem>>, %arg9: memref<1x128xf32, #tpu.memory_space<vmem>>, %arg10: memref<128x128xf32, #tpu.memory_space<vmem>>, %arg11: memref<128x128xf32, #tpu.memory_space<vmem>>) attributes {dimension_semantics = [#tpu.dimension_semantics<parallel>, #tpu.dimension_semantics<arbitrary>], iteration_bounds = array<i64: 2, 1>, scalar_prefetch = 0 : i64, scratch_operands = 1 : i64, tpu.core_type = #tpu.core_type<tc>, window_params = [{transform_indices = @transform_0, window_bounds = array<i64: 128, 256>}, {pipeline_mode = #tpu.pipeline_mode<synchronous>, transform_indices = @transform_1, window_bounds = array<i64: 256, 128>}, {pipeline_mode = #tpu.pipeline_mode<synchronous>, transform_indices = @transform_2, window_bounds = array<i64: 128, 128>}, {pipeline_mode = #tpu.pipeline_mode<synchronous>, transform_indices = @transform_3, window_bounds = array<i64: 1, 128>}, {pipeline_mode = #tpu.pipeline_mode<synchronous>, transform_indices = @transform_4, window_bounds = array<i64: 128, 128>}, {pipeline_mode = #tpu.pipeline_mode<synchronous>, transform_indices = @transform_5, window_bounds = array<i64: 1, 128>}, {pipeline_mode = #tpu.pipeline_mode<synchronous>, transform_indices = @transform_6, window_bounds = array<i64: 1, 128>}, {pipeline_mode = #tpu.pipeline_mode<synchronous>, transform_indices = @transform_7, window_bounds = array<i64: 1, 128>}, {transform_indices = @transform_8, window_bounds = array<i64: 128, 128>}]} {
    %c0_i32 = arith.constant 0 : i32
    %0 = arith.cmpi eq, %arg1, %c0_i32 : i32
    %1 = arith.extui %0 : i1 to i32
    %c0_i32_0 = arith.constant 0 : i32
    %2 = arith.cmpi ne, %1, %c0_i32_0 : i32
    scf.if %2 {
      %cst_9 = arith.constant 0.000000e+00 : f32
      %17 = vector.broadcast %cst_9 : f32 to vector<128x128xf32>
      %c0_10 = arith.constant 0 : index
      %c0_11 = arith.constant 0 : index
      %18 = vector.load %arg11[%c0_10, %c0_11] : memref<128x128xf32, #tpu.memory_space<vmem>>, vector<128x128xf32>
      tpu.vector_store %arg11[%c0_10, %c0_11], %17 {strides = array<i32>} : memref<128x128xf32, #tpu.memory_space<vmem>>, vector<128x128xf32>,
    } else {
    }
    %c0 = arith.constant 0 : index
    %c0_1 = arith.constant 0 : index
    %3 = vector.load %arg2[%c0, %c0_1] : memref<128x256xi8, #tpu.memory_space<vmem>>, vector<128x256xi8>
    %4 = arith.sitofp %3 : vector<128x256xi8> to vector<128x256xf32>
    %5 = arith.truncf %4 : vector<128x256xf32> to vector<128x256xbf16>
    %c256_i32 = arith.constant 256 : i32
    %6 = arith.muli %arg1, %c256_i32 : i32
    %7 = tpu.assume_multiple %6, 256 : i32
    %8 = arith.index_cast %7 : i32 to index
    %c0_2 = arith.constant 0 : index
    %9 = vector.load %arg3[%8, %c0_2] : memref<256x128xbf16, #tpu.memory_space<vmem>>, vector<256x128xbf16>
    %c0_3 = arith.constant 0 : index
    %c0_4 = arith.constant 0 : index
    %10 = vector.load %arg11[%c0_3, %c0_4] : memref<128x128xf32, #tpu.memory_space<vmem>>, vector<128x128xf32>
    %cst = arith.constant dense<0.000000e+00> : vector<128x128xf32>
    %11 = tpu.matmul %5, %9, %cst {dimension_numbers = #tpu.dot_dimension_numbers<[1], [0], [0], [1], [0, 0, 1, 1], [], []>} : vector<128x256xbf16>, vector<256x128xbf16>, vector<128x128xf32> -> vector<128x128xf32>
    %12 = arith.addf %10, %11 : vector<128x128xf32>
    %c0_5 = arith.constant 0 : index
    %c0_6 = arith.constant 0 : index
    %13 = vector.load %arg11[%c0_5, %c0_6] : memref<128x128xf32, #tpu.memory_space<vmem>>, vector<128x128xf32>
    tpu.vector_store %arg11[%c0_5, %c0_6], %12 {strides = array<i32>} : memref<128x128xf32, #tpu.memory_space<vmem>>, vector<128x128xf32>,
    %c0_i32_7 = arith.constant 0 : i32
    %14 = arith.cmpi eq, %arg1, %c0_i32_7 : i32
    %15 = arith.extui %14 : i1 to i32
    %c0_i32_8 = arith.constant 0 : i32
    %16 = arith.cmpi ne, %15, %c0_i32_8 : i32
    scf.if %16 {
      %c0_9 = arith.constant 0 : index
      %c0_10 = arith.constant 0 : index
      %17 = vector.load %arg11[%c0_9, %c0_10] : memref<128x128xf32, #tpu.memory_space<vmem>>, vector<128x128xf32>
      %18 = arith.truncf %17 : vector<128x128xf32> to vector<128x128xbf16>
      %c0_11 = arith.constant 0 : index
      %c0_12 = arith.constant 0 : index
      %19 = vector.load %arg4[%c0_11, %c0_12] : memref<128x128xbf16, #tpu.memory_space<vmem>>, vector<128x128xbf16>
      %cst_13 = arith.constant dense<0.000000e+00> : vector<128x128xf32>
      %20 = tpu.matmul %18, %19, %cst_13 {dimension_numbers = #tpu.dot_dimension_numbers<[1], [0], [0], [1], [0, 0, 1, 1], [], []>} : vector<128x128xbf16>, vector<128x128xbf16>, vector<128x128xf32> -> vector<128x128xf32>
      %c0_14 = arith.constant 0 : index
      %c0_15 = arith.constant 0 : index
      %21 = vector.load %arg5[%c0_14, %c0_15] : memref<1x128xf32, #tpu.memory_space<vmem>>, vector<1x128xf32>
      %22 = vector.broadcast %21 : vector<1x128xf32> to vector<128x128xf32>
      %23 = arith.addf %20, %22 : vector<128x128xf32>
      %cst_16 = arith.constant 0.000000e+00 : f32
      %24 = vector.broadcast %cst_16 : f32 to vector<128x128xf32>
      %25 = arith.maximumf %23, %24 : vector<128x128xf32>
      %26 = arith.truncf %25 : vector<128x128xf32> to vector<128x128xbf16>
      %c0_17 = arith.constant 0 : index
      %c0_18 = arith.constant 0 : index
      %27 = vector.load %arg6[%c0_17, %c0_18] : memref<128x128xbf16, #tpu.memory_space<vmem>>, vector<128x128xbf16>
      %cst_19 = arith.constant dense<0.000000e+00> : vector<128x128xf32>
      %28 = tpu.matmul %26, %27, %cst_19 {dimension_numbers = #tpu.dot_dimension_numbers<[1], [0], [0], [1], [0, 0, 1, 1], [], []>} : vector<128x128xbf16>, vector<128x128xbf16>, vector<128x128xf32> -> vector<128x128xf32>
      %c0_20 = arith.constant 0 : index
      %c0_21 = arith.constant 0 : index
      %29 = vector.load %arg7[%c0_20, %c0_21] : memref<1x128xf32, #tpu.memory_space<vmem>>, vector<1x128xf32>
      %30 = vector.broadcast %29 : vector<1x128xf32> to vector<128x128xf32>
      %31 = arith.addf %28, %30 : vector<128x128xf32>
      %c0_22 = arith.constant 0 : index
      %c0_23 = arith.constant 0 : index
      %32 = vector.load %arg8[%c0_22, %c0_23] : memref<1x128xf32, #tpu.memory_space<vmem>>, vector<1x128xf32>
      %33 = vector.broadcast %32 : vector<1x128xf32> to vector<128x128xf32>
      %34 = arith.mulf %31, %33 : vector<128x128xf32>
      %c0_24 = arith.constant 0 : index
      %c0_25 = arith.constant 0 : index
      %35 = vector.load %arg9[%c0_24, %c0_25] : memref<1x128xf32, #tpu.memory_space<vmem>>, vector<1x128xf32>
      %36 = vector.broadcast %35 : vector<1x128xf32> to vector<128x128xf32>
      %37 = arith.addf %34, %36 : vector<128x128xf32>
      %c0_26 = arith.constant 0 : index
      %c0_27 = arith.constant 0 : index
      %38 = vector.load %arg10[%c0_26, %c0_27] : memref<128x128xf32, #tpu.memory_space<vmem>>, vector<128x128xf32>
      tpu.vector_store %arg10[%c0_26, %c0_27], %37 {strides = array<i32>} : memref<128x128xf32, #tpu.memory_space<vmem>>, vector<128x128xf32>,
    } else {
    }
    return
  }
  func.func @transform_0(%arg0: i32, %arg1: i32) -> (i32, i32) {
    %c0_i32 = arith.constant 0 : i32
    return %arg0, %arg1 : i32, i32
  }
  func.func @transform_1(%arg0: i32, %arg1: i32) -> (i32, i32) {
    %c0_i32 = arith.constant 0 : i32
    %c0_i32_0 = arith.constant 0 : i32
    %c0_i32_1 = arith.constant 0 : i32
    return %c0_i32, %c0_i32_0 : i32, i32
  }
  func.func @transform_2(%arg0: i32, %arg1: i32) -> (i32, i32) {
    %c0_i32 = arith.constant 0 : i32
    %c0_i32_0 = arith.constant 0 : i32
    %c0_i32_1 = arith.constant 0 : i32
    return %c0_i32, %c0_i32_0 : i32, i32
  }
  func.func @transform_3(%arg0: i32, %arg1: i32) -> (i32, i32) {
    %c0_i32 = arith.constant 0 : i32
    %c0_i32_0 = arith.constant 0 : i32
    %c0_i32_1 = arith.constant 0 : i32
    return %c0_i32, %c0_i32_0 : i32, i32
  }
  func.func @transform_4(%arg0: i32, %arg1: i32) -> (i32, i32) {
    %c0_i32 = arith.constant 0 : i32
    %c0_i32_0 = arith.constant 0 : i32
    %c0_i32_1 = arith.constant 0 : i32
    return %c0_i32, %c0_i32_0 : i32, i32
  }
  func.func @transform_5(%arg0: i32, %arg1: i32) -> (i32, i32) {
    %c0_i32 = arith.constant 0 : i32
    %c0_i32_0 = arith.constant 0 : i32
    %c0_i32_1 = arith.constant 0 : i32
    return %c0_i32, %c0_i32_0 : i32, i32
  }
  func.func @transform_6(%arg0: i32, %arg1: i32) -> (i32, i32) {
    %c0_i32 = arith.constant 0 : i32
    %c0_i32_0 = arith.constant 0 : i32
    %c0_i32_1 = arith.constant 0 : i32
    return %c0_i32, %c0_i32_0 : i32, i32
  }
  func.func @transform_7(%arg0: i32, %arg1: i32) -> (i32, i32) {
    %c0_i32 = arith.constant 0 : i32
    %c0_i32_0 = arith.constant 0 : i32
    %c0_i32_1 = arith.constant 0 : i32
    return %c0_i32, %c0_i32_0 : i32, i32
  }
  func.func @transform_8(%arg0: i32, %arg1: i32) -> (i32, i32) {
    %c0_i32 = arith.constant 0 : i32
    %c0_i32_0 = arith.constant 0 : i32
    return %arg0, %c0_i32 : i32, i32
  }
}

module attributes {stable_mosaic.version = 11 : i64} {
  func.func @_decode_kernel(%arg0: i32, %arg1: memref<32x128xf32, #tpu.memory_space<vmem>>, %arg2: memref<32x128xf32, #tpu.memory_space<vmem>>, %arg3: memref<1x128xf32, #tpu.memory_space<vmem>>) attributes {dimension_semantics = [#tpu.dimension_semantics<parallel>], iteration_bounds = array<i64: 1>, scalar_prefetch = 0 : i64, scratch_operands = 0 : i64, tpu.core_type = #tpu.core_type<tc>, window_params = [{transform_indices = @transform_0, window_bounds = array<i64: 32, 128>}, {transform_indices = @transform_1, window_bounds = array<i64: 32, 128>}, {transform_indices = @transform_2, window_bounds = array<i64: 1, 128>}]} {
    %c0 = arith.constant 0 : index
    %c0_0 = arith.constant 0 : index
    %0 = vector.load %arg1[%c0, %c0_0] : memref<32x128xf32, #tpu.memory_space<vmem>>, vector<32x128xf32>
    %c0_1 = arith.constant 0 : index
    %c0_2 = arith.constant 0 : index
    %1 = vector.load %arg2[%c0_1, %c0_2] : memref<32x128xf32, #tpu.memory_space<vmem>>, vector<32x128xf32>
    %2 = arith.mulf %0, %1 : vector<32x128xf32>
    %cst = arith.constant dense<0.000000e+00> : vector<128xf32>
    %3 = vector.multi_reduction <add>, %2, %cst [0] : vector<32x128xf32> to vector<128xf32>
    %4 = vector.shape_cast %3 : vector<128xf32> to vector<1x128xf32>
    %c0_3 = arith.constant 0 : index
    %c0_4 = arith.constant 0 : index
    %5 = vector.load %arg3[%c0_3, %c0_4] : memref<1x128xf32, #tpu.memory_space<vmem>>, vector<1x128xf32>
    tpu.vector_store %arg3[%c0_3, %c0_4], %4 {strides = array<i32>} : memref<1x128xf32, #tpu.memory_space<vmem>>, vector<1x128xf32>,
    return
  }
  func.func @transform_0(%arg0: i32) -> (i32, i32) {
    %c0_i32 = arith.constant 0 : i32
    %c0_i32_0 = arith.constant 0 : i32
    return %c0_i32, %arg0 : i32, i32
  }
  func.func @transform_1(%arg0: i32) -> (i32, i32) {
    %c0_i32 = arith.constant 0 : i32
    %c0_i32_0 = arith.constant 0 : i32
    return %c0_i32, %arg0 : i32, i32
  }
  func.func @transform_2(%arg0: i32) -> (i32, i32) {
    %c0_i32 = arith.constant 0 : i32
    %c0_i32_0 = arith.constant 0 : i32
    return %c0_i32, %arg0 : i32, i32
  }
}

</mosaic_0001>

<llo_original>
// kernel: gnn_lp_forward.5
$region0: #{gnn_lp_forward.5}
  #allocation0 [shape = 'u32[]', space=smem, size = 0x4, offset = 0x4, fixed_abs, tag = 'smem constant byte address 0x4 - core index']
  #allocation1 [shape = 'u32[144,128]{1,0:T(1,128)}', space=vmem, size = 0x12000, scoped, tag = 'internal scratch']
  %s0 = inlined_call_operand.vmem [shape: f32[32,128], index: 0, kind: input, shape index: {}]
  %s1 = inlined_call_operand.vmem [shape: f32[32,128], index: 1, kind: input, shape index: {}]
  %s2 = inlined_call_operand.vmem [shape: f32[1,128], index: 2, kind: output, shape index: {}]
  %s3 = sld [smem:[#allocation0]]
  $region18: #{gnn_lp_forward.5} parent=0
    _
  %s5 = ssub.s32 1, %s3
  %s6 = scalar_select 0, %s5, %s3
  // Predicated region
  $region2: #{gnn_lp_forward.5} parent=0 // pred_check
    _
  $region3: #{gnn_lp_forward.5} parent=0 // pred_check_branch
    %8 = sbr.rel (0) target = $region5
  $region4: #{gnn_lp_forward.5} parent=0 // pred_region
    _
  $region5: #{gnn_lp_forward.5} parent=0 // pred_fallthru
    _
  // Predicated region
  $region6: #{gnn_lp_forward.5} parent=0 // pred_check
    _
  $region7: #{gnn_lp_forward.5} parent=0 // pred_check_branch
    %10 = sbr.rel (0) target = $region9
  $region8: #{gnn_lp_forward.5} parent=0 // pred_region
    _
  $region9: #{gnn_lp_forward.5} parent=0 // pred_fallthru
    _
  %v11 = vld [vmem:[%s0] sm:$0xff]
  %v12 = vld [vmem:[%s0 + $0x8] sm:$0xff]
  %v13 = vld [vmem:[%s0 + $0x10] sm:$0xff]
  %v14 = vld [vmem:[%s0 + $0x18] sm:$0xff]
  %v15 = vld [vmem:[%s1] sm:$0xff]
  %v16 = vld [vmem:[%s1 + $0x8] sm:$0xff]
  %v17 = vld [vmem:[%s1 + $0x10] sm:$0xff]
  %v18 = vld [vmem:[%s1 + $0x18] sm:$0xff]
  %v19 = vmul.f32 %v11, %v15
  %v20 = vmul.f32 %v12, %v16
  %v21 = vmul.f32 %v13, %v17
  %v22 = vmul.f32 %v14, %v18
  %v23 = vadd.f32 %v19, %v20
  %v24 = vadd.f32 %v23, %v21
  %v25 = vadd.f32 %v24, %v22
  %v26 = vrot.slane %v25, 4
  %v27 = vadd.f32 %v25, %v26
  %v28 = vrot.slane %v27, 2
  %v29 = vadd.f32 %v27, %v28
  %v30 = vrot.slane %v29, 1
  %v31 = vadd.f32 %v29, %v30
  %32 = vst [vmem:[%s2] sm:$0x1] %v31
  // Predicated region
  $region10: #{gnn_lp_forward.5} parent=0 // pred_check
    _
  $region11: #{gnn_lp_forward.5} parent=0 // pred_check_branch
    %34 = sbr.rel (0) target = $region13
  $region12: #{gnn_lp_forward.5} parent=0 // pred_region
    _
  $region13: #{gnn_lp_forward.5} parent=0 // pred_fallthru
    _
  // Predicated region
  $region14: #{gnn_lp_forward.5} parent=0 // pred_check
    _
  $region15: #{gnn_lp_forward.5} parent=0 // pred_check_branch
    %36 = sbr.rel (0) target = $region17
  $region16: #{gnn_lp_forward.5} parent=0 // pred_region
    _
  $region17: #{gnn_lp_forward.5} parent=0 // pred_fallthru
    _

// kernel: gnn_lp_forward.4
$region0: #{gnn_lp_forward.4}
  #allocation0 [shape = 'u32[]', space=smem, size = 0x4, offset = 0x4, fixed_abs, tag = 'smem constant byte address 0x4 - core index']
  #allocation1 [shape = 'u32[144,128]{1,0:T(1,128)}', space=vmem, size = 0x12000, scoped, tag = 'internal scratch']
  #allocation2 [shape = 'f32[128,128]{1,0:T(8,128)}', space=vmem, size = 0x10000, scoped, tag = 'scratch operand']
  %s0 = inlined_call_operand.vmem [shape: s8[256,256], index: 0, kind: input, shape index: {}]
  %s1 = inlined_call_operand.vmem [shape: bf16[256,128], index: 1, kind: input, shape index: {}]
  %s2 = inlined_call_operand.vmem [shape: bf16[128,128], index: 2, kind: input, shape index: {}]
  %s3 = inlined_call_operand.vmem [shape: f32[1,128], index: 3, kind: input, shape index: {}]
  %s4 = inlined_call_operand.vmem [shape: bf16[128,128], index: 4, kind: input, shape index: {}]
  %s5 = inlined_call_operand.vmem [shape: f32[1,128], index: 5, kind: input, shape index: {}]
  %s6 = inlined_call_operand.vmem [shape: f32[1,128], index: 6, kind: input, shape index: {}]
  %s7 = inlined_call_operand.vmem [shape: f32[1,128], index: 7, kind: input, shape index: {}]
  %s8 = inlined_call_operand.vmem [shape: f32[256,128], index: 8, kind: output, shape index: {}]
  %s9 = sld [smem:[#allocation0]]
  $region73: #{gnn_lp_forward.4} parent=0
    _
  %s11 = ssub.s32 1, %s9
  %s12 = scalar_select 0, %s11, %s9
  loop: start=0, step=1, limit=4
  $region2: #{gnn_lp_forward.4} parent=0 // loop_pre_header
    _
  $region3: #{gnn_lp_forward.4} parent=0 // loop_header
    %s14 = sphi 0, %s18
    %p15 = scmp.ge.s32.totalorder %s14, 4
    %s21 = sphi 0, %s33
    %s22 = sphi 0, %s29
    %s23 = sphi 0, %s21
    %s24 = sphi 0, %s22
    %s25 = sphi 0, %s23
    %s26 = sphi 0, %s24
    %s38 = sphi 0, %s40
    %s41 = sphi 0, %s38
    %s42 = sphi 0, %s41
    %s58 = sphi 0, %s42
    %s62 = sphi 0, %s62
    %s64 = sphi 0, %s62
    %s65 = sphi 0, %s64
    %s79 = sphi 0, %s65
    %s83 = sphi 0, %s83
    %s85 = sphi 0, %s83
    %s86 = sphi 0, %s85
    %s100 = sphi 0, %s86
    %s104 = sphi 0, %s104
    %s106 = sphi 0, %s104
    %s107 = sphi 0, %s106
    %s121 = sphi 0, %s107
    %s125 = sphi 0, %s125
    %s127 = sphi 0, %s125
    %s128 = sphi 0, %s127
    %s142 = sphi 0, %s128
    %s146 = sphi 0, %s146
    %s148 = sphi 0, %s146
    %s149 = sphi 0, %s148
    %s163 = sphi 0, %s149
    %s167 = sphi 0, %s167
    %s169 = sphi 0, %s167
    %s170 = sphi 0, %s169
    %s184 = sphi 0, %s170
    %s188 = sphi 0, %s188
    %s190 = sphi 0, %s188
    %s191 = sphi 0, %s190
    %s205 = sphi 0, %s191
    %s211 = sphi 0, %s213
    %s214 = sphi 0, %s211
    %s215 = sphi 0, %s214
    %s231 = sphi 0, %s215
  $region4: #{gnn_lp_forward.4} parent=0 // loop_header_branch
    %17 = sbr.rel (%p15) target = $region8
  $region5: #{gnn_lp_forward.4} parent=0 // loop_body
    %s19 = ssub.s32 %s14, 1
    %s20 = ssub.s32 %s14, 2
    %s27 = sadd.s32 1, %s22
    %p28 = scmp.ge.s32.totalorder %s27, 1
    %s29 = scalar_select %p28, 0, %s27
    %s30 = sadd.s32 1, %s21
    %s31 = scalar_select %p28, %s30, %s21
    %p32 = scmp.ge.s32.totalorder %s31, 2
    %s33 = scalar_select %p32, 0, %s31
    %s34 = ssub.s32 %s21, %s33
    %s35 = ssub.s32 %s22, %s29
    %s36 = sor.u32 %s34, %s35
    %p37 = scmp.eq.s32.totalorder %s36, 0
    %s39 = sadd.s32 %s38, 1
    %s40 = scalar_select %p37, %s38, %s39
    %p43 = pneg %p37
    %p44 = scmp.eq.s32.totalorder %s14, 1
    %p45 = por %p43, %p44
    %p46 = scmp.ne.s32.totalorder %s38, %s41
    %p47 = scmp.eq.s32.totalorder %s14, 0
    %p48 = por %p46, %p47
    %p49 = scmp.ne.s32.totalorder %s38, %s41
    %p50 = scmp.eq.s32.totalorder %s19, 1
    %p51 = por %p49, %p50
    %p52 = scmp.ne.s32.totalorder %s41, %s42
    %p53 = scmp.eq.s32.totalorder %s19, 0
    %p54 = por %p52, %p53
    %p55 = scmp.ne.s32.totalorder %s41, %s42
    %p56 = scmp.eq.s32.totalorder %s20, 1
    %p57 = por %p55, %p56
    %p59 = scmp.ne.s32.totalorder %s42, %s58
    %p60 = scmp.eq.s32.totalorder %s20, 0
    %p61 = por %p59, %p60
    %s63 = sadd.s32 %s62, 1
    %p66 = scmp.eq.s32.totalorder %s14, 1
    %p67 = scmp.ne.s32.totalorder %s62, %s64
    %p68 = scmp.eq.s32.totalorder %s14, 0
    %p69 = por %p67, %p68
    %p70 = scmp.ne.s32.totalorder %s62, %s64
    %p71 = scmp.eq.s32.totalorder %s19, 1
    %p72 = por %p70, %p71
    %p73 = scmp.ne.s32.totalorder %s64, %s65
    %p74 = scmp.eq.s32.totalorder %s19, 0
    %p75 = por %p73, %p74
    %p76 = scmp.ne.s32.totalorder %s64, %s65
    %p77 = scmp.eq.s32.totalorder %s20, 1
    %p78 = por %p76, %p77
    %p80 = scmp.ne.s32.totalorder %s65, %s79
    %p81 = scmp.eq.s32.totalorder %s20, 0
    %p82 = por %p80, %p81
    %s84 = sadd.s32 %s83, 1
    %p87 = scmp.eq.s32.totalorder %s14, 1
    %p88 = scmp.ne.s32.totalorder %s83, %s85
    %p89 = scmp.eq.s32.totalorder %s14, 0
    %p90 = por %p88, %p89
    %p91 = scmp.ne.s32.totalorder %s83, %s85
    %p92 = scmp.eq.s32.totalorder %s19, 1
    %p93 = por %p91, %p92
    %p94 = scmp.ne.s32.totalorder %s85, %s86
    %p95 = scmp.eq.s32.totalorder %s19, 0
    %p96 = por %p94, %p95
    %p97 = scmp.ne.s32.totalorder %s85, %s86
    %p98 = scmp.eq.s32.totalorder %s20, 1
    %p99 = por %p97, %p98
    %p101 = scmp.ne.s32.totalorder %s86, %s100
    %p102 = scmp.eq.s32.totalorder %s20, 0
    %p103 = por %p101, %p102
    %s105 = sadd.s32 %s104, 1
    %p108 = scmp.eq.s32.totalorder %s14, 1
    %p109 = scmp.ne.s32.totalorder %s104, %s106
    %p110 = scmp.eq.s32.totalorder %s14, 0
    %p111 = por %p109, %p110
    %p112 = scmp.ne.s32.totalorder %s104, %s106
    %p113 = scmp.eq.s32.totalorder %s19, 1
    %p114 = por %p112, %p113
    %p115 = scmp.ne.s32.totalorder %s106, %s107
    %p116 = scmp.eq.s32.totalorder %s19, 0
    %p117 = por %p115, %p116
    %p118 = scmp.ne.s32.totalorder %s106, %s107
    %p119 = scmp.eq.s32.totalorder %s20, 1
    %p120 = por %p118, %p119
    %p122 = scmp.ne.s32.totalorder %s107, %s121
    %p123 = scmp.eq.s32.totalorder %s20, 0
    %p124 = por %p122, %p123
    %s126 = sadd.s32 %s125, 1
    %p129 = scmp.eq.s32.totalorder %s14, 1
    %p130 = scmp.ne.s32.totalorder %s125, %s127
    %p131 = scmp.eq.s32.totalorder %s14, 0
    %p132 = por %p130, %p131
    %p133 = scmp.ne.s32.totalorder %s125, %s127
    %p134 = scmp.eq.s32.totalorder %s19, 1
    %p135 = por %p133, %p134
    %p136 = scmp.ne.s32.totalorder %s127, %s128
    %p137 = scmp.eq.s32.totalorder %s19, 0
    %p138 = por %p136, %p137
    %p139 = scmp.ne.s32.totalorder %s127, %s128
    %p140 = scmp.eq.s32.totalorder %s20, 1
    %p141 = por %p139, %p140
    %p143 = scmp.ne.s32.totalorder %s128, %s142
    %p144 = scmp.eq.s32.totalorder %s20, 0
    %p145 = por %p143, %p144
    %s147 = sadd.s32 %s146, 1
    %p150 = scmp.eq.s32.totalorder %s14, 1
    %p151 = scmp.ne.s32.totalorder %s146, %s148
    %p152 = scmp.eq.s32.totalorder %s14, 0
    %p153 = por %p151, %p152
    %p154 = scmp.ne.s32.totalorder %s146, %s148
    %p155 = scmp.eq.s32.totalorder %s19, 1
    %p156 = por %p154, %p155
    %p157 = scmp.ne.s32.totalorder %s148, %s149
    %p158 = scmp.eq.s32.totalorder %s19, 0
    %p159 = por %p157, %p158
    %p160 = scmp.ne.s32.totalorder %s148, %s149
    %p161 = scmp.eq.s32.totalorder %s20, 1
    %p162 = por %p160, %p161
    %p164 = scmp.ne.s32.totalorder %s149, %s163
    %p165 = scmp.eq.s32.totalorder %s20, 0
    %p166 = por %p164, %p165
    %s168 = sadd.s32 %s167, 1
    %p171 = scmp.eq.s32.totalorder %s14, 1
    %p172 = scmp.ne.s32.totalorder %s167, %s169
    %p173 = scmp.eq.s32.totalorder %s14, 0
    %p174 = por %p172, %p173
    %p175 = scmp.ne.s32.totalorder %s167, %s169
    %p176 = scmp.eq.s32.totalorder %s19, 1
    %p177 = por %p175, %p176
    %p178 = scmp.ne.s32.totalorder %s169, %s170
    %p179 = scmp.eq.s32.totalorder %s19, 0
    %p180 = por %p178, %p179
    %p181 = scmp.ne.s32.totalorder %s169, %s170
    %p182 = scmp.eq.s32.totalorder %s20, 1
    %p183 = por %p181, %p182
    %p185 = scmp.ne.s32.totalorder %s170, %s184
    %p186 = scmp.eq.s32.totalorder %s20, 0
    %p187 = por %p185, %p186
    %s189 = sadd.s32 %s188, 1
    %p192 = scmp.eq.s32.totalorder %s14, 1
    %p193 = scmp.ne.s32.totalorder %s188, %s190
    %p194 = scmp.eq.s32.totalorder %s14, 0
    %p195 = por %p193, %p194
    %p196 = scmp.ne.s32.totalorder %s188, %s190
    %p197 = scmp.eq.s32.totalorder %s19, 1
    %p198 = por %p196, %p197
    %p199 = scmp.ne.s32.totalorder %s190, %s191
    %p200 = scmp.eq.s32.totalorder %s19, 0
    %p201 = por %p199, %p200
    %p202 = scmp.ne.s32.totalorder %s190, %s191
    %p203 = scmp.eq.s32.totalorder %s20, 1
    %p204 = por %p202, %p203
    %p206 = scmp.ne.s32.totalorder %s191, %s205
    %p207 = scmp.eq.s32.totalorder %s20, 0
    %p208 = por %p206, %p207
    %s209 = ssub.s32 %s21, %s33
    %p210 = scmp.eq.s32.totalorder %s209, 0
    %s212 = sadd.s32 %s211, 1
    %s213 = scalar_select %p210, %s211, %s212
    %p216 = pneg %p210
    %p217 = scmp.eq.s32.totalorder %s14, 1
    %p218 = por %p216, %p217
    %p219 = scmp.ne.s32.totalorder %s211, %s214
    %p220 = scmp.eq.s32.totalorder %s14, 0
    %p221 = por %p219, %p220
    %p222 = scmp.ne.s32.totalorder %s211, %s214
    %p223 = scmp.eq.s32.totalorder %s19, 1
    %p224 = por %p222, %p223
    %p225 = scmp.ne.s32.totalorder %s214, %s215
    %p226 = scmp.eq.s32.totalorder %s19, 0
    %p227 = por %p225, %p226
    %p228 = scmp.ne.s32.totalorder %s214, %s215
    %p229 = scmp.eq.s32.totalorder %s20, 1
    %p230 = por %p228, %p229
    %p232 = scmp.ne.s32.totalorder %s215, %s231
    %p233 = scmp.eq.s32.totalorder %s20, 0
    %p234 = por %p232, %p233
    %p235 = scmp.le.s32.totalorder 1, %s14
    %p236 = scmp.lt.s32.totalorder %s14, 3
    %p237 = pnand %p235, %p236
    %p238 = pneg %p237
    // Predicated region
    $region9: #{gnn_lp_forward.4} parent=5 // pred_check
      _
    $region10: #{gnn_lp_forward.4} parent=5 // pred_check_branch
      %240 = sbr.rel (%p237) target = $region12
    $region11: #{gnn_lp_forward.4} parent=5 // pred_region
      %s241 = ssub.s32 %s14, 1
      // Predicated region
      $region13: #{gnn_lp_forward.4} parent=11 // pred_check
        %p242 = pneg %p75
      $region14: #{gnn_lp_forward.4} parent=11 // pred_check_branch
        %244 = sbr.rel (%p242) target = $region16
      $region15: #{gnn_lp_forward.4} parent=11 // pred_region
        _
      $region16: #{gnn_lp_forward.4} parent=11 // pred_fallthru
        _
      // Predicated region
      $region17: #{gnn_lp_forward.4} parent=11 // pred_check
        %p245 = pneg %p96
      $region18: #{gnn_lp_forward.4} parent=11 // pred_check_branch
        %247 = sbr.rel (%p245) target = $region20
      $region19: #{gnn_lp_forward.4} parent=11 // pred_region
        _
      $region20: #{gnn_lp_forward.4} parent=11 // pred_fallthru
        _
      // Predicated region
      $region21: #{gnn_lp_forward.4} parent=11 // pred_check
        %p248 = pneg %p117
      $region22: #{gnn_lp_forward.4} parent=11 // pred_check_branch
        %250 = sbr.rel (%p248) target = $region24
      $region23: #{gnn_lp_forward.4} parent=11 // pred_region
        _
      $region24: #{gnn_lp_forward.4} parent=11 // pred_fallthru
        _
      // Predicated region
      $region25: #{gnn_lp_forward.4} parent=11 // pred_check
        %p251 = pneg %p138
      $region26: #{gnn_lp_forward.4} parent=11 // pred_check_branch
        %253 = sbr.rel (%p251) target = $region28
      $region27: #{gnn_lp_forward.4} parent=11 // pred_region
        _
      $region28: #{gnn_lp_forward.4} parent=11 // pred_fallthru
        _
      // Predicated region
      $region29: #{gnn_lp_forward.4} parent=11 // pred_check
        %p254 = pneg %p159
      $region30: #{gnn_lp_forward.4} parent=11 // pred_check_branch
        %256 = sbr.rel (%p254) target = $region32
      $region31: #{gnn_lp_forward.4} parent=11 // pred_region
        _
      $region32: #{gnn_lp_forward.4} parent=11 // pred_fallthru
        _
      // Predicated region
      $region33: #{gnn_lp_forward.4} parent=11 // pred_check
        %p257 = pneg %p180
      $region34: #{gnn_lp_forward.4} parent=11 // pred_check_branch
        %259 = sbr.rel (%p257) target = $region36
      $region35: #{gnn_lp_forward.4} parent=11 // pred_region
        _
      $region36: #{gnn_lp_forward.4} parent=11 // pred_fallthru
        _
      // Predicated region
      $region37: #{gnn_lp_forward.4} parent=11 // pred_check
        %p260 = pneg %p201
      $region38: #{gnn_lp_forward.4} parent=11 // pred_check_branch
        %262 = sbr.rel (%p260) target = $region40
      $region39: #{gnn_lp_forward.4} parent=11 // pred_region
        _
      $region40: #{gnn_lp_forward.4} parent=11 // pred_fallthru
        _
    $region12: #{gnn_lp_forward.4} parent=5 // pred_fallthru
      _
    %p263 = scmp.lt.s32.totalorder %s14, 2
    // Predicated region
    $region41: #{gnn_lp_forward.4} parent=5 // pred_check
      %p264 = pneg %p263
    $region42: #{gnn_lp_forward.4} parent=5 // pred_check_branch
      %266 = sbr.rel (%p264) target = $region44
    $region43: #{gnn_lp_forward.4} parent=5 // pred_region
      // Predicated region
      $region45: #{gnn_lp_forward.4} parent=43 // pred_check
        %p267 = pneg %p48
      $region46: #{gnn_lp_forward.4} parent=43 // pred_check_branch
        %269 = sbr.rel (%p267) target = $region48
      $region47: #{gnn_lp_forward.4} parent=43 // pred_region
        %s270 = smul.u32 16, %s21
        %s271 = smul.u32 2, %s22
        %p272 = scmp.lt.s32.totalorder %s270, 31
        %s273 = scalar_select %p272, %s270, 31
        %p274 = scmp.lt.s32.totalorder %s271, 1
        %s275 = scalar_select %p274, %s271, 1
        %s276 = smul.addr %s273, 2
        %s277 = sadd.s32 %s275, %s276
        %s278 = smul.addr %s277, 2
        %s279 = scalar_lea.vmem %s0, %s278
        %s280 = smul.u32 16, %s21
        %s281 = smul.u32 2, %s22
      $region48: #{gnn_lp_forward.4} parent=43 // pred_fallthru
        _
    $region44: #{gnn_lp_forward.4} parent=5 // pred_fallthru
      _
    %p282 = scmp.le.s32.totalorder 1, %s14
    %p283 = scmp.lt.s32.totalorder %s14, 3
    %p284 = pnand %p282, %p283
    %p285 = pneg %p284
    // Predicated region
    $region49: #{gnn_lp_forward.4} parent=5 // pred_check
      _
    $region50: #{gnn_lp_forward.4} parent=5 // pred_check_branch
      %287 = sbr.rel (%p284) target = $region52
    $region51: #{gnn_lp_forward.4} parent=5 // pred_region
      %s288 = ssub.s32 %s14, 1
      %s289 = smul.u32 16, %s23
      %s290 = smul.u32 2, %s24
      %p291 = scmp.lt.s32.totalorder %s289, 31
      %s292 = scalar_select %p291, %s289, 31
      %p293 = scmp.lt.s32.totalorder %s290, 1
      %s294 = scalar_select %p293, %s290, 1
      %s295 = smul.addr %s292, 2
      %s296 = sadd.s32 %s294, %s295
      %s297 = smul.addr %s296, 2
      %s298 = scalar_lea.vmem %s0, %s297
      %p299 = pneg %p54
      %p300 = pneg %p51
      %p301 = pneg %p75
      %p302 = pneg %p72
      %p303 = pneg %p96
      %p304 = pneg %p93
      %p305 = pneg %p117
      %p306 = pneg %p114
      %p307 = pneg %p138
      %p308 = pneg %p135
      %p309 = pneg %p159
      %p310 = pneg %p156
      %p311 = pneg %p180
      %p312 = pneg %p177
      %p313 = pneg %p201
      %p314 = pneg %p198
      %p315 = pneg %p227
      %p316 = pneg %p224
      %s317 = smul.u32 16, %s23
      %p318 = scmp.lt.s32.totalorder %s317, 31
      %s319 = scalar_select %p318, %s317, 31
      %s320 = smul.addr %s319, 8
      %s321 = scalar_lea.vmem %s8, %s320
      %s322 = smul.u32 16, %s23
      %s323 = smul.u32 2, %s24
      %p324 = scmp.lt.s32.totalorder %s322, 31
      %s325 = scalar_select %p324, %s322, 31
      %p326 = scmp.lt.s32.totalorder %s323, 1
      %s327 = scalar_select %p326, %s323, 1
      %s328 = smul.addr %s325, 2
      %s329 = sadd.s32 %s327, %s328
      %s330 = smul.addr %s329, 2
      %s331 = scalar_lea.vmem %s0, %s330
      %s332 = smul.u32 16, %s23
      %s333 = smul.u32 2, %s24
      %s334 = smul.u32 16, %s23
      %p335 = scmp.lt.s32.totalorder %s334, 31
      %s336 = scalar_select %p335, %s334, 31
      %s337 = smul.addr %s336, 8
      %s338 = scalar_lea.vmem %s8, %s337
      %s339 = smul.u32 16, %s23
      %p341 = scmp.eq.s32.totalorder %s24, 0
      // Predicated region
      $region53: #{gnn_lp_forward.4} parent=51 // pred_check
        %p342 = pneg %p341
      $region54: #{gnn_lp_forward.4} parent=51 // pred_check_branch
        %344 = sbr.rel (%p342) target = $region56
      $region55: #{gnn_lp_forward.4} parent=51 // pred_region
        %345 = vst [vmem:[#allocation2] sm:$0xff] 0.0
        %346 = vst [vmem:[#allocation2 + $0x8] sm:$0xff] 0.0
        %347 = vst [vmem:[#allocation2 + $0x10] sm:$0xff] 0.0
        %348 = vst [vmem:[#allocation2 + $0x18] sm:$0xff] 0.0
        %349 = vst [vmem:[#allocation2 + $0x20] sm:$0xff] 0.0
        %350 = vst [vmem:[#allocation2 + $0x28] sm:$0xff] 0.0
        %351 = vst [vmem:[#allocation2 + $0x30] sm:$0xff] 0.0
        %352 = vst [vmem:[#allocation2 + $0x38] sm:$0xff] 0.0
        %353 = vst [vmem:[#allocation2 + $0x40] sm:$0xff] 0.0
        %354 = vst [vmem:[#allocation2 + $0x48] sm:$0xff] 0.0
        %355 = vst [vmem:[#allocation2 + $0x50] sm:$0xff] 0.0
        %356 = vst [vmem:[#allocation2 + $0x58] sm:$0xff] 0.0
        %357 = vst [vmem:[#allocation2 + $0x60] sm:$0xff] 0.0
        %358 = vst [vmem:[#allocation2 + $0x68] sm:$0xff] 0.0
        %359 = vst [vmem:[#allocation2 + $0x70] sm:$0xff] 0.0
        %360 = vst [vmem:[#allocation2 + $0x78] sm:$0xff] 0.0
      $region56: #{gnn_lp_forward.4} parent=51 // pred_fallthru
        _
      %v361 = vld [vmem:[%s331] sm:$0xf]
      %v362 = vld [vmem:[%s331 + $0x4] sm:$0xf]
      %v363 = vld [vmem:[%s331 + $0x8] sm:$0xf]
      %v364 = vld [vmem:[%s331 + $0xc] sm:$0xf]
      %v365 = vld [vmem:[%s331 + $0x10] sm:$0xf]
      %v366 = vld [vmem:[%s331 + $0x14] sm:$0xf]
      %v367 = vld [vmem:[%s331 + $0x18] sm:$0xf]
      %v368 = vld [vmem:[%s331 + $0x1c] sm:$0xf]
      %v369 = vld [vmem:[%s331 + $0x20] sm:$0xf]
      %v370 = vld [vmem:[%s331 + $0x24] sm:$0xf]
      %v371 = vld [vmem:[%s331 + $0x28] sm:$0xf]
      %v372 = vld [vmem:[%s331 + $0x2c] sm:$0xf]
      %v373 = vld [vmem:[%s331 + $0x30] sm:$0xf]
      %v374 = vld [vmem:[%s331 + $0x34] sm:$0xf]
      %v375 = vld [vmem:[%s331 + $0x38] sm:$0xf]
      %v376 = vld [vmem:[%s331 + $0x3c] sm:$0xf]
      %v377 = vunpack.c.l.s8.bf16 %v361
      %v378 = vunpack.c.l.s8.bf16 %v362
      %v379 = vunpack.c.l.s8.bf16 %v363
      %v380 = vunpack.c.l.s8.bf16 %v364
      %v381 = vunpack.c.l.s8.bf16 %v365
      %v382 = vunpack.c.l.s8.bf16 %v366
      %v383 = vunpack.c.l.s8.bf16 %v367
      %v384 = vunpack.c.l.s8.bf16 %v368
      %v385 = vunpack.c.l.s8.bf16 %v369
      %v386 = vunpack.c.l.s8.bf16 %v370
      %v387 = vunpack.c.l.s8.bf16 %v371
      %v388 = vunpack.c.l.s8.bf16 %v372
      %v389 = vunpack.c.l.s8.bf16 %v373
      %v390 = vunpack.c.l.s8.bf16 %v374
      %v391 = vunpack.c.l.s8.bf16 %v375
      %v392 = vunpack.c.l.s8.bf16 %v376
      %s393 = smul.u32 %s24, 256
      %s394 = sshra.s32 %s393, 3
      %s395 = sand.u32 %s393, 7
      %s396 = smul.addr %s394, 4
      %s397 = scalar_lea.vmem %s1, %s396
      %v398 = vld [vmem:[%s397] sm:$0xf]
      %v399 = vld [vmem:[%s397 + $0x4] sm:$0xf]
      %v400 = vld [vmem:[%s397 + $0x8] sm:$0xf]
      %v401 = vld [vmem:[%s397 + $0xc] sm:$0xf]
      %v402 = vld [vmem:[%s397 + $0x10] sm:$0xf]
      %v403 = vld [vmem:[%s397 + $0x14] sm:$0xf]
      %v404 = vld [vmem:[%s397 + $0x18] sm:$0xf]
      %v405 = vld [vmem:[%s397 + $0x1c] sm:$0xf]
      %v406 = vld [vmem:[%s397 + $0x20] sm:$0xf]
      %v407 = vld [vmem:[%s397 + $0x24] sm:$0xf]
      %v408 = vld [vmem:[%s397 + $0x28] sm:$0xf]
      %v409 = vld [vmem:[%s397 + $0x2c] sm:$0xf]
      %v410 = vld [vmem:[%s397 + $0x30] sm:$0xf]
      %v411 = vld [vmem:[%s397 + $0x34] sm:$0xf]
      %v412 = vld [vmem:[%s397 + $0x38] sm:$0xf]
      %v413 = vld [vmem:[%s397 + $0x3c] sm:$0xf]
      %v414 = vld [vmem:[%s397 + $0x40] sm:$0xf]
      %v415 = vld [vmem:[%s397 + $0x44] sm:$0xf]
      %v416 = vld [vmem:[%s397 + $0x48] sm:$0xf]
      %v417 = vld [vmem:[%s397 + $0x4c] sm:$0xf]
      %v418 = vld [vmem:[%s397 + $0x50] sm:$0xf]
      %v419 = vld [vmem:[%s397 + $0x54] sm:$0xf]
      %v420 = vld [vmem:[%s397 + $0x58] sm:$0xf]
      %v421 = vld [vmem:[%s397 + $0x5c] sm:$0xf]
      %v422 = vld [vmem:[%s397 + $0x60] sm:$0xf]
      %v423 = vld [vmem:[%s397 + $0x64] sm:$0xf]
      %v424 = vld [vmem:[%s397 + $0x68] sm:$0xf]
      %v425 = vld [vmem:[%s397 + $0x6c] sm:$0xf]
      %v426 = vld [vmem:[%s397 + $0x70] sm:$0xf]
      %v427 = vld [vmem:[%s397 + $0x74] sm:$0xf]
      %v428 = vld [vmem:[%s397 + $0x78] sm:$0xf]
      %v429 = vld [vmem:[%s397 + $0x7c] sm:$0xf]
      %v430 = vld [vmem:[#allocation2] sm:$0xff]
      %v431 = vld [vmem:[#allocation2 + $0x8] sm:$0xff]
      %v432 = vld [vmem:[#allocation2 + $0x10] sm:$0xff]
      %v433 = vld [vmem:[#allocation2 + $0x18] sm:$0xff]
      %v434 = vld [vmem:[#allocation2 + $0x20] sm:$0xff]
      %v435 = vld [vmem:[#allocation2 + $0x28] sm:$0xff]
      %v436 = vld [vmem:[#allocation2 + $0x30] sm:$0xff]
      %v437 = vld [vmem:[#allocation2 + $0x38] sm:$0xff]
      %v438 = vld [vmem:[#allocation2 + $0x40] sm:$0xff]
      %v439 = vld [vmem:[#allocation2 + $0x48] sm:$0xff]
      %v440 = vld [vmem:[#allocation2 + $0x50] sm:$0xff]
      %v441 = vld [vmem:[#allocation2 + $0x58] sm:$0xff]
      %v442 = vld [vmem:[#allocation2 + $0x60] sm:$0xff]
      %v443 = vld [vmem:[#allocation2 + $0x68] sm:$0xff]
      %v444 = vld [vmem:[#allocation2 + $0x70] sm:$0xff]
      %v445 = vld [vmem:[#allocation2 + $0x78] sm:$0xff]
      %v462 = vunpack.c.l.b16 %v377
      %v463 = vunpack.c.h.b16 %v377
      %v464 = vunpack.c.l.b16 %v378
      %v465 = vunpack.c.h.b16 %v378
      %v466 = vunpack.c.l.b16 %v379
      %v467 = vunpack.c.h.b16 %v379
      %v468 = vunpack.c.l.b16 %v380
      %v469 = vunpack.c.h.b16 %v380
      %v470 = vunpack.c.l.b16 %v381
      %v471 = vunpack.c.h.b16 %v381
      %v472 = vunpack.c.l.b16 %v382
      %v473 = vunpack.c.h.b16 %v382
      %v474 = vunpack.c.l.b16 %v383
      %v475 = vunpack.c.h.b16 %v383
      %v476 = vunpack.c.l.b16 %v384
      %v477 = vunpack.c.h.b16 %v384
      %v478 = vunpack.c.l.b16 %v385
      %v479 = vunpack.c.h.b16 %v385
      %v480 = vunpack.c.l.b16 %v386
      %v481 = vunpack.c.h.b16 %v386
      %v482 = vunpack.c.l.b16 %v387
      %v483 = vunpack.c.h.b16 %v387
      %v484 = vunpack.c.l.b16 %v388
      %v485 = vunpack.c.h.b16 %v388
      %v486 = vunpack.c.l.b16 %v389
      %v487 = vunpack.c.h.b16 %v389
      %v488 = vunpack.c.l.b16 %v390
      %v489 = vunpack.c.h.b16 %v390
      %v490 = vunpack.c.l.b16 %v391
      %v491 = vunpack.c.h.b16 %v391
      %v492 = vunpack.c.l.b16 %v392
      %v493 = vunpack.c.h.b16 %v392
      %v494 = vpack.c.b16 %v464, %v462
      %v495 = vpack.c.b16 %v465, %v463
      %v496 = vpack.c.b16 %v468, %v466
      %v497 = vpack.c.b16 %v469, %v467
      %v498 = vpack.c.b16 %v472, %v470
      %v499 = vpack.c.b16 %v473, %v471
      %v500 = vpack.c.b16 %v476, %v474
      %v501 = vpack.c.b16 %v477, %v475
      %v502 = vpack.c.b16 %v480, %v478
      %v503 = vpack.c.b16 %v481, %v479
      %v504 = vpack.c.b16 %v484, %v482
      %v505 = vpack.c.b16 %v485, %v483
      %v506 = vpack.c.b16 %v488, %v486
      %v507 = vpack.c.b16 %v489, %v487
      %v508 = vpack.c.b16 %v492, %v490
      %v509 = vpack.c.b16 %v493, %v491
      %v558 = vunpack.c.l.b16 %v398
      %v559 = vunpack.c.l.b16 %v399
      %v560 = vunpack.c.l.b16 %v400
      %v561 = vunpack.c.l.b16 %v401
      %v562 = vunpack.c.l.b16 %v402
      %v563 = vunpack.c.l.b16 %v403
      %v564 = vunpack.c.l.b16 %v404
      %v565 = vunpack.c.l.b16 %v405
      %v566 = vunpack.c.l.b16 %v406
      %v567 = vunpack.c.l.b16 %v407
      %v568 = vunpack.c.l.b16 %v408
      %v569 = vunpack.c.l.b16 %v409
      %v570 = vunpack.c.l.b16 %v410
      %v571 = vunpack.c.l.b16 %v411
      %v572 = vunpack.c.l.b16 %v412
      %v573 = vunpack.c.l.b16 %v413
      %v574 = vunpack.c.l.b16 %v414
      %v575 = vunpack.c.l.b16 %v415
      %v576 = vunpack.c.l.b16 %v416
      %v577 = vunpack.c.l.b16 %v417
      %v578 = vunpack.c.l.b16 %v418
      %v579 = vunpack.c.l.b16 %v419
      %v580 = vunpack.c.l.b16 %v420
      %v581 = vunpack.c.l.b16 %v421
      %v582 = vunpack.c.l.b16 %v422
      %v583 = vunpack.c.l.b16 %v423
      %v584 = vunpack.c.l.b16 %v424
      %v585 = vunpack.c.l.b16 %v425
      %v586 = vunpack.c.l.b16 %v426
      %v587 = vunpack.c.l.b16 %v427
      %v588 = vunpack.c.l.b16 %v428
      %v589 = vunpack.c.l.b16 %v429
      %v590 = vpack.c.b16 %v559, %v558
      %v591 = vpack.c.b16 %v561, %v560
      %v592 = vpack.c.b16 %v563, %v562
      %v593 = vpack.c.b16 %v565, %v564
      %v594 = vpack.c.b16 %v567, %v566
      %v595 = vpack.c.b16 %v569, %v568
      %v596 = vpack.c.b16 %v571, %v570
      %v597 = vpack.c.b16 %v573, %v572
      %v598 = vpack.c.b16 %v575, %v574
      %v599 = vpack.c.b16 %v577, %v576
      %v600 = vpack.c.b16 %v579, %v578
      %v601 = vpack.c.b16 %v581, %v580
      %v602 = vpack.c.b16 %v583, %v582
      %v603 = vpack.c.b16 %v585, %v584
      %v604 = vpack.c.b16 %v587, %v586
      %v605 = vpack.c.b16 %v589, %v588
      %622 = vmatprep.subr.bf16.mxu0 0
      %623 = vmatpush1.bf16.msra.mxu0 %v597
      %624 = vmatprep.subr.bf16.mxu0 0
      %625 = vmatpush1.bf16.msra.mxu0 %v596
      %626 = vmatprep.subr.bf16.mxu0 0
      %627 = vmatpush1.bf16.msra.mxu0 %v595
      %628 = vmatprep.subr.bf16.mxu0 0
      %629 = vmatpush1.bf16.msra.mxu0 %v594
      %630 = vmatprep.subr.bf16.mxu0 0
      %631 = vmatpush1.bf16.msra.mxu0 %v593
      %632 = vmatprep.subr.bf16.mxu0 0
      %633 = vmatpush1.bf16.msra.mxu0 %v592
      %634 = vmatprep.subr.bf16.mxu0 0
      %635 = vmatpush1.bf16.msra.mxu0 %v591
      %636 = vmatprep.subr.bf16.mxu0 0
      %637 = vmatpush1.bf16.msra.mxu0 %v590
      %638 = vmatprep.subr.bf16.mxu0 0
      %639 = vmatpush2.bf16.msra.mxu0 %v605
      %640 = vmatprep.subr.bf16.mxu0 0
      %641 = vmatpush2.bf16.msra.mxu0 %v604
      %642 = vmatprep.subr.bf16.mxu0 0
      %643 = vmatpush2.bf16.msra.mxu0 %v603
      %644 = vmatprep.subr.bf16.mxu0 0
      %645 = vmatpush2.bf16.msra.mxu0 %v602
      %646 = vmatprep.subr.bf16.mxu0 0
      %647 = vmatpush2.bf16.msra.mxu0 %v601
      %648 = vmatprep.subr.bf16.mxu0 0
      %649 = vmatpush2.bf16.msra.mxu0 %v600
      %650 = vmatprep.subr.bf16.mxu0 0
      %651 = vmatpush2.bf16.msra.mxu0 %v599
      %652 = vmatprep.subr.bf16.mxu0 0
      %653 = vmatpush2.bf16.msra.mxu0 %v598
      %654 = vmatprep.mubr.bf16.mxu0 %v495
      %655 = vmatmul.mubr.bf16.gmra.mxu0 %v494
      %v656 = vpop.f32.mrf.mxu0
      %v657 = vadd.f32 0.0, %v656
      %v658 = vpop.f32.mrf.mxu0
      %v659 = vpop.f32.mrf.mxu0
      %v660 = vadd.f32 0.0, %v659
      %v661 = vpop.f32.mrf.mxu0
      %662 = vmatprep.mubr.bf16.mxu0 %v497
      %663 = vmatmul.mubr.bf16.gmra.mxu0 %v496
      %v664 = vpop.f32.mrf.mxu0
      %v665 = vadd.f32 0.0, %v664
      %v666 = vpop.f32.mrf.mxu0
      %v667 = vpop.f32.mrf.mxu0
      %v668 = vadd.f32 0.0, %v667
      %v669 = vpop.f32.mrf.mxu0
      %670 = vmatprep.mubr.bf16.mxu0 %v499
      %671 = vmatmul.mubr.bf16.gmra.mxu0 %v498
      %v672 = vpop.f32.mrf.mxu0
      %v673 = vadd.f32 0.0, %v672
      %v674 = vpop.f32.mrf.mxu0
      %v675 = vpop.f32.mrf.mxu0
      %v676 = vadd.f32 0.0, %v675
      %v677 = vpop.f32.mrf.mxu0
      %678 = vmatprep.mubr.bf16.mxu0 %v501
      %679 = vmatmul.mubr.bf16.gmra.mxu0 %v500
      %v680 = vpop.f32.mrf.mxu0
      %v681 = vadd.f32 0.0, %v680
      %v682 = vpop.f32.mrf.mxu0
      %v683 = vpop.f32.mrf.mxu0
      %v684 = vadd.f32 0.0, %v683
      %v685 = vpop.f32.mrf.mxu0
      %686 = vmatprep.mubr.bf16.mxu0 %v503
      %687 = vmatmul.mubr.bf16.gmra.mxu0 %v502
      %v688 = vpop.f32.mrf.mxu0
      %v689 = vadd.f32 0.0, %v688
      %v690 = vpop.f32.mrf.mxu0
      %v691 = vpop.f32.mrf.mxu0
      %v692 = vadd.f32 0.0, %v691
      %v693 = vpop.f32.mrf.mxu0
      %694 = vmatprep.mubr.bf16.mxu0 %v505
      %695 = vmatmul.mubr.bf16.gmra.mxu0 %v504
      %v696 = vpop.f32.mrf.mxu0
      %v697 = vadd.f32 0.0, %v696
      %v698 = vpop.f32.mrf.mxu0
      %v699 = vpop.f32.mrf.mxu0
      %v700 = vadd.f32 0.0, %v699
      %v701 = vpop.f32.mrf.mxu0
      %702 = vmatprep.mubr.bf16.mxu0 %v507
      %703 = vmatmul.mubr.bf16.gmra.mxu0 %v506
      %v704 = vpop.f32.mrf.mxu0
      %v705 = vadd.f32 0.0, %v704
      %v706 = vpop.f32.mrf.mxu0
      %v707 = vpop.f32.mrf.mxu0
      %v708 = vadd.f32 0.0, %v707
      %v709 = vpop.f32.mrf.mxu0
      %710 = vmatprep.mubr.bf16.mxu0 %v509
      %711 = vmatmul.mubr.bf16.gmra.mxu0 %v508
      %v712 = vpop.f32.mrf.mxu0
      %v713 = vadd.f32 0.0, %v712
      %v714 = vpop.f32.mrf.mxu0
      %v715 = vpop.f32.mrf.mxu0
      %v716 = vadd.f32 0.0, %v715
      %v717 = vpop.f32.mrf.mxu0
      %718 = vdwg.mxu0
      %v719 = vadd.f32 %v430, %v657
      %v720 = vadd.f32 %v431, %v660
      %v721 = vadd.f32 %v432, %v665
      %v722 = vadd.f32 %v433, %v668
      %v723 = vadd.f32 %v434, %v673
      %v724 = vadd.f32 %v435, %v676
      %v725 = vadd.f32 %v436, %v681
      %v726 = vadd.f32 %v437, %v684
      %v727 = vadd.f32 %v438, %v689
      %v728 = vadd.f32 %v439, %v692
      %v729 = vadd.f32 %v440, %v697
      %v730 = vadd.f32 %v441, %v700
      %v731 = vadd.f32 %v442, %v705
      %v732 = vadd.f32 %v443, %v708
      %v733 = vadd.f32 %v444, %v713
      %v734 = vadd.f32 %v445, %v716
      %735 = vst [vmem:[#allocation2] sm:$0xff] %v719
      %736 = vst [vmem:[#allocation2 + $0x8] sm:$0xff] %v720
      %737 = vst [vmem:[#allocation2 + $0x10] sm:$0xff] %v721
      %738 = vst [vmem:[#allocation2 + $0x18] sm:$0xff] %v722
      %739 = vst [vmem:[#allocation2 + $0x20] sm:$0xff] %v723
      %740 = vst [vmem:[#allocation2 + $0x28] sm:$0xff] %v724
      %741 = vst [vmem:[#allocation2 + $0x30] sm:$0xff] %v725
      %742 = vst [vmem:[#allocation2 + $0x38] sm:$0xff] %v726
      %743 = vst [vmem:[#allocation2 + $0x40] sm:$0xff] %v727
      %744 = vst [vmem:[#allocation2 + $0x48] sm:$0xff] %v728
      %745 = vst [vmem:[#allocation2 + $0x50] sm:$0xff] %v729
      %746 = vst [vmem:[#allocation2 + $0x58] sm:$0xff] %v730
      %747 = vst [vmem:[#allocation2 + $0x60] sm:$0xff] %v731
      %748 = vst [vmem:[#allocation2 + $0x68] sm:$0xff] %v732
      %749 = vst [vmem:[#allocation2 + $0x70] sm:$0xff] %v733
      %750 = vst [vmem:[#allocation2 + $0x78] sm:$0xff] %v734
      // Predicated region
      $region57: #{gnn_lp_forward.4} parent=51 // pred_check
        %p751 = pneg %p341
      $region58: #{gnn_lp_forward.4} parent=51 // pred_check_branch
        %753 = sbr.rel (%p751) target = $region60
      $region59: #{gnn_lp_forward.4} parent=51 // pred_region
        %v754 = vld [vmem:[#allocation2] sm:$0xff]
        %v755 = vld [vmem:[#allocation2 + $0x8] sm:$0xff]
        %v756 = vld [vmem:[#allocation2 + $0x10] sm:$0xff]
        %v757 = vld [vmem:[#allocation2 + $0x18] sm:$0xff]
        %v758 = vld [vmem:[#allocation2 + $0x20] sm:$0xff]
        %v759 = vld [vmem:[#allocation2 + $0x28] sm:$0xff]
        %v760 = vld [vmem:[#allocation2 + $0x30] sm:$0xff]
        %v761 = vld [vmem:[#allocation2 + $0x38] sm:$0xff]
        %v762 = vld [vmem:[#allocation2 + $0x40] sm:$0xff]
        %v763 = vld [vmem:[#allocation2 + $0x48] sm:$0xff]
        %v764 = vld [vmem:[#allocation2 + $0x50] sm:$0xff]
        %v765 = vld [vmem:[#allocation2 + $0x58] sm:$0xff]
        %v766 = vld [vmem:[#allocation2 + $0x60] sm:$0xff]
        %v767 = vld [vmem:[#allocation2 + $0x68] sm:$0xff]
        %v768 = vld [vmem:[#allocation2 + $0x70] sm:$0xff]
        %v769 = vld [vmem:[#allocation2 + $0x78] sm:$0xff]
        %v770 = vpack.c.bf16 %v755, %v754
        %v771 = vpack.c.bf16 %v757, %v756
        %v772 = vpack.c.bf16 %v759, %v758
        %v773 = vpack.c.bf16 %v761, %v760
        %v774 = vpack.c.bf16 %v763, %v762
        %v775 = vpack.c.bf16 %v765, %v764
        %v776 = vpack.c.bf16 %v767, %v766
        %v777 = vpack.c.bf16 %v769, %v768
        %v778 = vld [vmem:[%s2] sm:$0xf]
        %v779 = vld [vmem:[%s2 + $0x4] sm:$0xf]
        %v780 = vld [vmem:[%s2 + $0x8] sm:$0xf]
        %v781 = vld [vmem:[%s2 + $0xc] sm:$0xf]
        %v782 = vld [vmem:[%s2 + $0x10] sm:$0xf]
        %v783 = vld [vmem:[%s2 + $0x14] sm:$0xf]
        %v784 = vld [vmem:[%s2 + $0x18] sm:$0xf]
        %v785 = vld [vmem:[%s2 + $0x1c] sm:$0xf]
        %v786 = vld [vmem:[%s2 + $0x20] sm:$0xf]
        %v787 = vld [vmem:[%s2 + $0x24] sm:$0xf]
        %v788 = vld [vmem:[%s2 + $0x28] sm:$0xf]
        %v789 = vld [vmem:[%s2 + $0x2c] sm:$0xf]
        %v790 = vld [vmem:[%s2 + $0x30] sm:$0xf]
        %v791 = vld [vmem:[%s2 + $0x34] sm:$0xf]
        %v792 = vld [vmem:[%s2 + $0x38] sm:$0xf]
        %v793 = vld [vmem:[%s2 + $0x3c] sm:$0xf]
        %v794 = vld [vmem:[%s3] sm:$0x1]
        %v796 = vlaneseq
        %v797 = vshrl.u32 %v796, 7
        %v798 = vsub.s32 0, %v797
        %v799 = vrot.slane %v794, %v798
        %v817 = vunpack.c.l.b16 %v778
        %v818 = vunpack.c.l.b16 %v779
        %v819 = vunpack.c.l.b16 %v780
        %v820 = vunpack.c.l.b16 %v781
        %v821 = vunpack.c.l.b16 %v782
        %v822 = vunpack.c.l.b16 %v783
        %v823 = vunpack.c.l.b16 %v784
        %v824 = vunpack.c.l.b16 %v785
        %v825 = vunpack.c.l.b16 %v786
        %v826 = vunpack.c.l.b16 %v787
        %v827 = vunpack.c.l.b16 %v788
        %v828 = vunpack.c.l.b16 %v789
        %v829 = vunpack.c.l.b16 %v790
        %v830 = vunpack.c.l.b16 %v791
        %v831 = vunpack.c.l.b16 %v792
        %v832 = vunpack.c.l.b16 %v793
        %v833 = vpack.c.b16 %v818, %v817
        %v834 = vpack.c.b16 %v820, %v819
        %v835 = vpack.c.b16 %v822, %v821
        %v836 = vpack.c.b16 %v824, %v823
        %v837 = vpack.c.b16 %v826, %v825
        %v838 = vpack.c.b16 %v828, %v827
        %v839 = vpack.c.b16 %v830, %v829
        %v840 = vpack.c.b16 %v832, %v831
        %849 = vmatprep.subr.bf16.mxu0 0
        %850 = vmatpush1.bf16.msra.mxu0 %v840
        %851 = vmatprep.subr.bf16.mxu0 0
        %852 = vmatpush1.bf16.msra.mxu0 %v839
        %853 = vmatprep.subr.bf16.mxu0 0
        %854 = vmatpush1.bf16.msra.mxu0 %v838
        %855 = vmatprep.subr.bf16.mxu0 0
        %856 = vmatpush1.bf16.msra.mxu0 %v837
        %857 = vmatprep.subr.bf16.mxu0 0
        %858 = vmatpush1.bf16.msra.mxu0 %v836
        %859 = vmatprep.subr.bf16.mxu0 0
        %860 = vmatpush1.bf16.msra.mxu0 %v835
        %861 = vmatprep.subr.bf16.mxu0 0
        %862 = vmatpush1.bf16.msra.mxu0 %v834
        %863 = vmatprep.subr.bf16.mxu0 0
        %864 = vmatpush1.bf16.msra.mxu0 %v833
        %865 = vmatprep.subr.bf16.mxu0 0
        %866 = vmatpush2.bf16.msra.mxu0 0
        %867 = vmatprep.subr.bf16.mxu0 0
        %868 = vmatpush2.bf16.msra.mxu0 0
        %869 = vmatprep.subr.bf16.mxu0 0
        %870 = vmatpush2.bf16.msra.mxu0 0
        %871 = vmatprep.subr.bf16.mxu0 0
        %872 = vmatpush2.bf16.msra.mxu0 0
        %873 = vmatprep.subr.bf16.mxu0 0
        %874 = vmatpush2.bf16.msra.mxu0 0
        %875 = vmatprep.subr.bf16.mxu0 0
        %876 = vmatpush2.bf16.msra.mxu0 0
        %877 = vmatprep.subr.bf16.mxu0 0
        %878 = vmatpush2.bf16.msra.mxu0 0
        %879 = vmatprep.subr.bf16.mxu0 0
        %880 = vmatpush2.bf16.msra.mxu0 0
        %881 = vmatprep.mubr.bf16.mxu0 0
        %882 = vmatmul.mubr.bf16.gmra.mxu0 %v770
        %v883 = vpop.f32.mrf.mxu0
        %v884 = vadd.f32 %v799, %v883
        %v885 = vpop.f32.mrf.mxu0
        %v886 = vpop.f32.mrf.mxu0
        %v887 = vadd.f32 %v799, %v886
        %v888 = vpop.f32.mrf.mxu0
        %889 = vmatprep.mubr.bf16.mxu0 0
        %890 = vmatmul.mubr.bf16.gmra.mxu0 %v771
        %v891 = vpop.f32.mrf.mxu0
        %v892 = vadd.f32 %v799, %v891
        %v893 = vpop.f32.mrf.mxu0
        %v894 = vpop.f32.mrf.mxu0
        %v895 = vadd.f32 %v799, %v894
        %v896 = vpop.f32.mrf.mxu0
        %897 = vmatprep.mubr.bf16.mxu0 0
        %898 = vmatmul.mubr.bf16.gmra.mxu0 %v772
        %v899 = vpop.f32.mrf.mxu0
        %v900 = vadd.f32 %v799, %v899
        %v901 = vpop.f32.mrf.mxu0
        %v902 = vpop.f32.mrf.mxu0
        %v903 = vadd.f32 %v799, %v902
        %v904 = vpop.f32.mrf.mxu0
        %905 = vmatprep.mubr.bf16.mxu0 0
        %906 = vmatmul.mubr.bf16.gmra.mxu0 %v773
        %v907 = vpop.f32.mrf.mxu0
        %v908 = vadd.f32 %v799, %v907
        %v909 = vpop.f32.mrf.mxu0
        %v910 = vpop.f32.mrf.mxu0
        %v911 = vadd.f32 %v799, %v910
        %v912 = vpop.f32.mrf.mxu0
        %913 = vmatprep.mubr.bf16.mxu0 0
        %914 = vmatmul.mubr.bf16.gmra.mxu0 %v774
        %v915 = vpop.f32.mrf.mxu0
        %v916 = vadd.f32 %v799, %v915
        %v917 = vpop.f32.mrf.mxu0
        %v918 = vpop.f32.mrf.mxu0
        %v919 = vadd.f32 %v799, %v918
        %v920 = vpop.f32.mrf.mxu0
        %921 = vmatprep.mubr.bf16.mxu0 0
        %922 = vmatmul.mubr.bf16.gmra.mxu0 %v775
        %v923 = vpop.f32.mrf.mxu0
        %v924 = vadd.f32 %v799, %v923
        %v925 = vpop.f32.mrf.mxu0
        %v926 = vpop.f32.mrf.mxu0
        %v927 = vadd.f32 %v799, %v926
        %v928 = vpop.f32.mrf.mxu0
        %929 = vmatprep.mubr.bf16.mxu0 0
        %930 = vmatmul.mubr.bf16.gmra.mxu0 %v776
        %v931 = vpop.f32.mrf.mxu0
        %v932 = vadd.f32 %v799, %v931
        %v933 = vpop.f32.mrf.mxu0
        %v934 = vpop.f32.mrf.mxu0
        %v935 = vadd.f32 %v799, %v934
        %v936 = vpop.f32.mrf.mxu0
        %937 = vmatprep.mubr.bf16.mxu0 0
        %938 = vmatmul.mubr.bf16.gmra.mxu0 %v777
        %v939 = vpop.f32.mrf.mxu0
        %v940 = vadd.f32 %v799, %v939
        %v941 = vpop.f32.mrf.mxu0
        %v942 = vpop.f32.mrf.mxu0
        %v943 = vadd.f32 %v799, %v942
        %v944 = vpop.f32.mrf.mxu0
        %945 = vdwg.mxu0
        %v946 = vmax.f32 %v884, 0.0
        %v947 = vmax.f32 %v887, 0.0
        %v948 = vmax.f32 %v892, 0.0
        %v949 = vmax.f32 %v895, 0.0
        %v950 = vmax.f32 %v900, 0.0
        %v951 = vmax.f32 %v903, 0.0
        %v952 = vmax.f32 %v908, 0.0
        %v953 = vmax.f32 %v911, 0.0
        %v954 = vmax.f32 %v916, 0.0
        %v955 = vmax.f32 %v919, 0.0
        %v956 = vmax.f32 %v924, 0.0
        %v957 = vmax.f32 %v927, 0.0
        %v958 = vmax.f32 %v932, 0.0
        %v959 = vmax.f32 %v935, 0.0
        %v960 = vmax.f32 %v940, 0.0
        %v961 = vmax.f32 %v943, 0.0
        %v962 = vpack.c.bf16 %v947, %v946
        %v963 = vpack.c.bf16 %v949, %v948
        %v964 = vpack.c.bf16 %v951, %v950
        %v965 = vpack.c.bf16 %v953, %v952
        %v966 = vpack.c.bf16 %v955, %v954
        %v967 = vpack.c.bf16 %v957, %v956
        %v968 = vpack.c.bf16 %v959, %v958
        %v969 = vpack.c.bf16 %v961, %v960
        %v970 = vld [vmem:[%s4] sm:$0xf]
        %v971 = vld [vmem:[%s4 + $0x4] sm:$0xf]
        %v972 = vld [vmem:[%s4 + $0x8] sm:$0xf]
        %v973 = vld [vmem:[%s4 + $0xc] sm:$0xf]
        %v974 = vld [vmem:[%s4 + $0x10] sm:$0xf]
        %v975 = vld [vmem:[%s4 + $0x14] sm:$0xf]
        %v976 = vld [vmem:[%s4 + $0x18] sm:$0xf]
        %v977 = vld [vmem:[%s4 + $0x1c] sm:$0xf]
        %v978 = vld [vmem:[%s4 + $0x20] sm:$0xf]
        %v979 = vld [vmem:[%s4 + $0x24] sm:$0xf]
        %v980 = vld [vmem:[%s4 + $0x28] sm:$0xf]
        %v981 = vld [vmem:[%s4 + $0x2c] sm:$0xf]
        %v982 = vld [vmem:[%s4 + $0x30] sm:$0xf]
        %v983 = vld [vmem:[%s4 + $0x34] sm:$0xf]
        %v984 = vld [vmem:[%s4 + $0x38] sm:$0xf]
        %v985 = vld [vmem:[%s4 + $0x3c] sm:$0xf]
        %v986 = vld [vmem:[%s5] sm:$0x1]
        %v988 = vlaneseq
        %v989 = vshrl.u32 %v988, 7
        %v990 = vsub.s32 0, %v989
        %v991 = vrot.slane %v986, %v990
        %v1009 = vunpack.c.l.b16 %v970
        %v1010 = vunpack.c.l.b16 %v971
        %v1011 = vunpack.c.l.b16 %v972
        %v1012 = vunpack.c.l.b16 %v973
        %v1013 = vunpack.c.l.b16 %v974
        %v1014 = vunpack.c.l.b16 %v975
        %v1015 = vunpack.c.l.b16 %v976
        %v1016 = vunpack.c.l.b16 %v977
        %v1017 = vunpack.c.l.b16 %v978
        %v1018 = vunpack.c.l.b16 %v979
        %v1019 = vunpack.c.l.b16 %v980
        %v1020 = vunpack.c.l.b16 %v981
        %v1021 = vunpack.c.l.b16 %v982
        %v1022 = vunpack.c.l.b16 %v983
        %v1023 = vunpack.c.l.b16 %v984
        %v1024 = vunpack.c.l.b16 %v985
        %v1025 = vpack.c.b16 %v1010, %v1009
        %v1026 = vpack.c.b16 %v1012, %v1011
        %v1027 = vpack.c.b16 %v1014, %v1013
        %v1028 = vpack.c.b16 %v1016, %v1015
        %v1029 = vpack.c.b16 %v1018, %v1017
        %v1030 = vpack.c.b16 %v1020, %v1019
        %v1031 = vpack.c.b16 %v1022, %v1021
        %v1032 = vpack.c.b16 %v1024, %v1023
        %1041 = vmatprep.subr.bf16.mxu0 0
        %1042 = vmatpush1.bf16.msra.mxu0 %v1032
        %1043 = vmatprep.subr.bf16.mxu0 0
        %1044 = vmatpush1.bf16.msra.mxu0 %v1031
        %1045 = vmatprep.subr.bf16.mxu0 0
        %1046 = vmatpush1.bf16.msra.mxu0 %v1030
        %1047 = vmatprep.subr.bf16.mxu0 0
        %1048 = vmatpush1.bf16.msra.mxu0 %v1029
        %1049 = vmatprep.subr.bf16.mxu0 0
        %1050 = vmatpush1.bf16.msra.mxu0 %v1028
        %1051 = vmatprep.subr.bf16.mxu0 0
        %1052 = vmatpush1.bf16.msra.mxu0 %v1027
        %1053 = vmatprep.subr.bf16.mxu0 0
        %1054 = vmatpush1.bf16.msra.mxu0 %v1026
        %1055 = vmatprep.subr.bf16.mxu0 0
        %1056 = vmatpush1.bf16.msra.mxu0 %v1025
        %1057 = vmatprep.subr.bf16.mxu0 0
        %1058 = vmatpush2.bf16.msra.mxu0 0
        %1059 = vmatprep.subr.bf16.mxu0 0
        %1060 = vmatpush2.bf16.msra.mxu0 0
        %1061 = vmatprep.subr.bf16.mxu0 0
        %1062 = vmatpush2.bf16.msra.mxu0 0
        %1063 = vmatprep.subr.bf16.mxu0 0
        %1064 = vmatpush2.bf16.msra.mxu0 0
        %1065 = vmatprep.subr.bf16.mxu0 0
        %1066 = vmatpush2.bf16.msra.mxu0 0
        %1067 = vmatprep.subr.bf16.mxu0 0
        %1068 = vmatpush2.bf16.msra.mxu0 0
        %1069 = vmatprep.subr.bf16.mxu0 0
        %1070 = vmatpush2.bf16.msra.mxu0 0
        %1071 = vmatprep.subr.bf16.mxu0 0
        %1072 = vmatpush2.bf16.msra.mxu0 0
        %1073 = vmatprep.mubr.bf16.mxu0 0
        %1074 = vmatmul.mubr.bf16.gmra.mxu0 %v962
        %v1075 = vpop.f32.mrf.mxu0
        %v1076 = vadd.f32 %v991, %v1075
        %v1077 = vpop.f32.mrf.mxu0
        %v1078 = vpop.f32.mrf.mxu0
        %v1079 = vadd.f32 %v991, %v1078
        %v1080 = vpop.f32.mrf.mxu0
        %1081 = vmatprep.mubr.bf16.mxu0 0
        %1082 = vmatmul.mubr.bf16.gmra.mxu0 %v963
        %v1083 = vpop.f32.mrf.mxu0
        %v1084 = vadd.f32 %v991, %v1083
        %v1085 = vpop.f32.mrf.mxu0
        %v1086 = vpop.f32.mrf.mxu0
        %v1087 = vadd.f32 %v991, %v1086
        %v1088 = vpop.f32.mrf.mxu0
        %1089 = vmatprep.mubr.bf16.mxu0 0
        %1090 = vmatmul.mubr.bf16.gmra.mxu0 %v964
        %v1091 = vpop.f32.mrf.mxu0
        %v1092 = vadd.f32 %v991, %v1091
        %v1093 = vpop.f32.mrf.mxu0
        %v1094 = vpop.f32.mrf.mxu0
        %v1095 = vadd.f32 %v991, %v1094
        %v1096 = vpop.f32.mrf.mxu0
        %1097 = vmatprep.mubr.bf16.mxu0 0
        %1098 = vmatmul.mubr.bf16.gmra.mxu0 %v965
        %v1099 = vpop.f32.mrf.mxu0
        %v1100 = vadd.f32 %v991, %v1099
        %v1101 = vpop.f32.mrf.mxu0
        %v1102 = vpop.f32.mrf.mxu0
        %v1103 = vadd.f32 %v991, %v1102
        %v1104 = vpop.f32.mrf.mxu0
        %1105 = vmatprep.mubr.bf16.mxu0 0
        %1106 = vmatmul.mubr.bf16.gmra.mxu0 %v966
        %v1107 = vpop.f32.mrf.mxu0
        %v1108 = vadd.f32 %v991, %v1107
        %v1109 = vpop.f32.mrf.mxu0
        %v1110 = vpop.f32.mrf.mxu0
        %v1111 = vadd.f32 %v991, %v1110
        %v1112 = vpop.f32.mrf.mxu0
        %1113 = vmatprep.mubr.bf16.mxu0 0
        %1114 = vmatmul.mubr.bf16.gmra.mxu0 %v967
        %v1115 = vpop.f32.mrf.mxu0
        %v1116 = vadd.f32 %v991, %v1115
        %v1117 = vpop.f32.mrf.mxu0
        %v1118 = vpop.f32.mrf.mxu0
        %v1119 = vadd.f32 %v991, %v1118
        %v1120 = vpop.f32.mrf.mxu0
        %1121 = vmatprep.mubr.bf16.mxu0 0
        %1122 = vmatmul.mubr.bf16.gmra.mxu0 %v968
        %v1123 = vpop.f32.mrf.mxu0
        %v1124 = vadd.f32 %v991, %v1123
        %v1125 = vpop.f32.mrf.mxu0
        %v1126 = vpop.f32.mrf.mxu0
        %v1127 = vadd.f32 %v991, %v1126
        %v1128 = vpop.f32.mrf.mxu0
        %1129 = vmatprep.mubr.bf16.mxu0 0
        %1130 = vmatmul.mubr.bf16.gmra.mxu0 %v969
        %v1131 = vpop.f32.mrf.mxu0
        %v1132 = vadd.f32 %v991, %v1131
        %v1133 = vpop.f32.mrf.mxu0
        %v1134 = vpop.f32.mrf.mxu0
        %v1135 = vadd.f32 %v991, %v1134
        %v1136 = vpop.f32.mrf.mxu0
        %1137 = vdwg.mxu0
        %v1138 = vld [vmem:[%s6] sm:$0x1]
        %v1140 = vlaneseq
        %v1141 = vshrl.u32 %v1140, 7
        %v1142 = vsub.s32 0, %v1141
        %v1143 = vrot.slane %v1138, %v1142
        %v1145 = vmul.f32 %v1076, %v1143
        %v1146 = vmul.f32 %v1079, %v1143
        %v1147 = vmul.f32 %v1084, %v1143
        %v1148 = vmul.f32 %v1087, %v1143
        %v1149 = vmul.f32 %v1092, %v1143
        %v1150 = vmul.f32 %v1095, %v1143
        %v1151 = vmul.f32 %v1100, %v1143
        %v1152 = vmul.f32 %v1103, %v1143
        %v1153 = vmul.f32 %v1108, %v1143
        %v1154 = vmul.f32 %v1111, %v1143
        %v1155 = vmul.f32 %v1116, %v1143
        %v1156 = vmul.f32 %v1119, %v1143
        %v1157 = vmul.f32 %v1124, %v1143
        %v1158 = vmul.f32 %v1127, %v1143
        %v1159 = vmul.f32 %v1132, %v1143
        %v1160 = vmul.f32 %v1135, %v1143
        %v1161 = vld [vmem:[%s7] sm:$0x1]
        %v1163 = vlaneseq
        %v1164 = vshrl.u32 %v1163, 7
        %v1165 = vsub.s32 0, %v1164
        %v1166 = vrot.slane %v1161, %v1165
        %v1168 = vadd.f32 %v1145, %v1166
        %v1169 = vadd.f32 %v1146, %v1166
        %v1170 = vadd.f32 %v1147, %v1166
        %v1171 = vadd.f32 %v1148, %v1166
        %v1172 = vadd.f32 %v1149, %v1166
        %v1173 = vadd.f32 %v1150, %v1166
        %v1174 = vadd.f32 %v1151, %v1166
        %v1175 = vadd.f32 %v1152, %v1166
        %v1176 = vadd.f32 %v1153, %v1166
        %v1177 = vadd.f32 %v1154, %v1166
        %v1178 = vadd.f32 %v1155, %v1166
        %v1179 = vadd.f32 %v1156, %v1166
        %v1180 = vadd.f32 %v1157, %v1166
        %v1181 = vadd.f32 %v1158, %v1166
        %v1182 = vadd.f32 %v1159, %v1166
        %v1183 = vadd.f32 %v1160, %v1166
        %1184 = vst [vmem:[%s338] sm:$0xff] %v1168
        %1185 = vst [vmem:[%s338 + $0x8] sm:$0xff] %v1169
        %1186 = vst [vmem:[%s338 + $0x10] sm:$0xff] %v1170
        %1187 = vst [vmem:[%s338 + $0x18] sm:$0xff] %v1171
        %1188 = vst [vmem:[%s338 + $0x20] sm:$0xff] %v1172
        %1189 = vst [vmem:[%s338 + $0x28] sm:$0xff] %v1173
        %1190 = vst [vmem:[%s338 + $0x30] sm:$0xff] %v1174
        %1191 = vst [vmem:[%s338 + $0x38] sm:$0xff] %v1175
        %1192 = vst [vmem:[%s338 + $0x40] sm:$0xff] %v1176
        %1193 = vst [vmem:[%s338 + $0x48] sm:$0xff] %v1177
        %1194 = vst [vmem:[%s338 + $0x50] sm:$0xff] %v1178
        %1195 = vst [vmem:[%s338 + $0x58] sm:$0xff] %v1179
        %1196 = vst [vmem:[%s338 + $0x60] sm:$0xff] %v1180
        %1197 = vst [vmem:[%s338 + $0x68] sm:$0xff] %v1181
        %1198 = vst [vmem:[%s338 + $0x70] sm:$0xff] %v1182
        %1199 = vst [vmem:[%s338 + $0x78] sm:$0xff] %v1183
      $region60: #{gnn_lp_forward.4} parent=51 // pred_fallthru
        _
      %s1200 = smul.u32 16, %s23
      %p1201 = scmp.lt.s32.totalorder %s1200, 31
      %s1202 = scalar_select %p1201, %s1200, 31
      %s1203 = smul.addr %s1202, 8
      %s1204 = scalar_lea.vmem %s8, %s1203
      // Predicated region
      $region61: #{gnn_lp_forward.4} parent=51 // pred_check
        %p1205 = pneg %p224
      $region62: #{gnn_lp_forward.4} parent=51 // pred_check_branch
        %1207 = sbr.rel (%p1205) target = $region64
      $region63: #{gnn_lp_forward.4} parent=51 // pred_region
        %s1208 = smul.u32 16, %s23
      $region64: #{gnn_lp_forward.4} parent=51 // pred_fallthru
        _
    $region52: #{gnn_lp_forward.4} parent=5 // pred_fallthru
      _
    %p1209 = scmp.le.s32.totalorder 2, %s14
    // Predicated region
    $region65: #{gnn_lp_forward.4} parent=5 // pred_check
      %p1210 = pneg %p1209
    $region66: #{gnn_lp_forward.4} parent=5 // pred_check_branch
      %1212 = sbr.rel (%p1210) target = $region68
    $region67: #{gnn_lp_forward.4} parent=5 // pred_region
      %s1213 = ssub.s32 %s14, 2
      // Predicated region
      $region69: #{gnn_lp_forward.4} parent=67 // pred_check
        %p1214 = pneg %p230
      $region70: #{gnn_lp_forward.4} parent=67 // pred_check_branch
        %1216 = sbr.rel (%p1214) target = $region72
      $region71: #{gnn_lp_forward.4} parent=67 // pred_region
        %s1217 = smul.u32 16, %s25
        %p1218 = scmp.lt.s32.totalorder %s1217, 31
        %s1219 = scalar_select %p1218, %s1217, 31
        %s1220 = smul.addr %s1219, 8
        %s1221 = scalar_lea.vmem %s8, %s1220
      $region72: #{gnn_lp_forward.4} parent=67 // pred_fallthru
        _
    $region68: #{gnn_lp_forward.4} parent=5 // pred_fallthru
      _
  $region6: #{gnn_lp_forward.4} parent=0 // loop_footer
    %s18 = sadd.s32 1, %s14
  $region7: #{gnn_lp_forward.4} parent=0 // loop_footer_branch
    %13 = sbr.rel target = $region3
  $region8: #{gnn_lp_forward.4} parent=0 // loop_exit
    _

// kernel: gnn_lp_forward.3
$region0: #{gnn_lp_forward.3}
  #allocation0 [shape = 'u32[]', space=smem, size = 0x4, offset = 0x4, fixed_abs, tag = 'smem constant byte address 0x4 - core index']
  #allocation1 [shape = 'u32[144,128]{1,0:T(1,128)}', space=vmem, size = 0x12000, scoped, tag = 'internal scratch']
  #allocation2 [shape = 'f32[128,128]{1,0:T(8,128)}', space=vmem, size = 0x10000, scoped, tag = 'scratch operand']
  %s0 = inlined_call_operand.vmem [shape: s8[256,256], index: 0, kind: input, shape index: {}]
  %s1 = inlined_call_operand.vmem [shape: bf16[256,128], index: 1, kind: input, shape index: {}]
  %s2 = inlined_call_operand.vmem [shape: bf16[128,128], index: 2, kind: input, shape index: {}]
  %s3 = inlined_call_operand.vmem [shape: f32[1,128], index: 3, kind: input, shape index: {}]
  %s4 = inlined_call_operand.vmem [shape: bf16[128,128], index: 4, kind: input, shape index: {}]
  %s5 = inlined_call_operand.vmem [shape: f32[1,128], index: 5, kind: input, shape index: {}]
  %s6 = inlined_call_operand.vmem [shape: f32[1,128], index: 6, kind: input, shape index: {}]
  %s7 = inlined_call_operand.vmem [shape: f32[1,128], index: 7, kind: input, shape index: {}]
  %s8 = inlined_call_operand.vmem [shape: bf16[256,128], index: 8, kind: output, shape index: {}]
  %s9 = sld [smem:[#allocation0]]
  $region73: #{gnn_lp_forward.3} parent=0
    _
  %s11 = ssub.s32 1, %s9
  %s12 = scalar_select 0, %s11, %s9
  loop: start=0, step=1, limit=4
  $region2: #{gnn_lp_forward.3} parent=0 // loop_pre_header
    _
  $region3: #{gnn_lp_forward.3} parent=0 // loop_header
    %s14 = sphi 0, %s18
    %p15 = scmp.ge.s32.totalorder %s14, 4
    %s21 = sphi 0, %s33
    %s22 = sphi 0, %s29
    %s23 = sphi 0, %s21
    %s24 = sphi 0, %s22
    %s25 = sphi 0, %s23
    %s26 = sphi 0, %s24
    %s38 = sphi 0, %s40
    %s41 = sphi 0, %s38
    %s42 = sphi 0, %s41
    %s58 = sphi 0, %s42
    %s62 = sphi 0, %s62
    %s64 = sphi 0, %s62
    %s65 = sphi 0, %s64
    %s79 = sphi 0, %s65
    %s83 = sphi 0, %s83
    %s85 = sphi 0, %s83
    %s86 = sphi 0, %s85
    %s100 = sphi 0, %s86
    %s104 = sphi 0, %s104
    %s106 = sphi 0, %s104
    %s107 = sphi 0, %s106
    %s121 = sphi 0, %s107
    %s125 = sphi 0, %s125
    %s127 = sphi 0, %s125
    %s128 = sphi 0, %s127
    %s142 = sphi 0, %s128
    %s146 = sphi 0, %s146
    %s148 = sphi 0, %s146
    %s149 = sphi 0, %s148
    %s163 = sphi 0, %s149
    %s167 = sphi 0, %s167
    %s169 = sphi 0, %s167
    %s170 = sphi 0, %s169
    %s184 = sphi 0, %s170
    %s188 = sphi 0, %s188
    %s190 = sphi 0, %s188
    %s191 = sphi 0, %s190
    %s205 = sphi 0, %s191
    %s211 = sphi 0, %s213
    %s214 = sphi 0, %s211
    %s215 = sphi 0, %s214
    %s231 = sphi 0, %s215
  $region4: #{gnn_lp_forward.3} parent=0 // loop_header_branch
    %17 = sbr.rel (%p15) target = $region8
  $region5: #{gnn_lp_forward.3} parent=0 // loop_body
    %s19 = ssub.s32 %s14, 1
    %s20 = ssub.s32 %s14, 2
    %s27 = sadd.s32 1, %s22
    %p28 = scmp.ge.s32.totalorder %s27, 1
    %s29 = scalar_select %p28, 0, %s27
    %s30 = sadd.s32 1, %s21
    %s31 = scalar_select %p28, %s30, %s21
    %p32 = scmp.ge.s32.totalorder %s31, 2
    %s33 = scalar_select %p32, 0, %s31
    %s34 = ssub.s32 %s21, %s33
    %s35 = ssub.s32 %s22, %s29
    %s36 = sor.u32 %s34, %s35
    %p37 = scmp.eq.s32.totalorder %s36, 0
    %s39 = sadd.s32 %s38, 1
    %s40 = scalar_select %p37, %s38, %s39
    %p43 = pneg %p37
    %p44 = scmp.eq.s32.totalorder %s14, 1
    %p45 = por %p43, %p44
    %p46 = scmp.ne.s32.totalorder %s38, %s41
    %p47 = scmp.eq.s32.totalorder %s14, 0
    %p48 = por %p46, %p47
    %p49 = scmp.ne.s32.totalorder %s38, %s41
    %p50 = scmp.eq.s32.totalorder %s19, 1
    %p51 = por %p49, %p50
    %p52 = scmp.ne.s32.totalorder %s41, %s42
    %p53 = scmp.eq.s32.totalorder %s19, 0
    %p54 = por %p52, %p53
    %p55 = scmp.ne.s32.totalorder %s41, %s42
    %p56 = scmp.eq.s32.totalorder %s20, 1
    %p57 = por %p55, %p56
    %p59 = scmp.ne.s32.totalorder %s42, %s58
    %p60 = scmp.eq.s32.totalorder %s20, 0
    %p61 = por %p59, %p60
    %s63 = sadd.s32 %s62, 1
    %p66 = scmp.eq.s32.totalorder %s14, 1
    %p67 = scmp.ne.s32.totalorder %s62, %s64
    %p68 = scmp.eq.s32.totalorder %s14, 0
    %p69 = por %p67, %p68
    %p70 = scmp.ne.s32.totalorder %s62, %s64
    %p71 = scmp.eq.s32.totalorder %s19, 1
    %p72 = por %p70, %p71
    %p73 = scmp.ne.s32.totalorder %s64, %s65
    %p74 = scmp.eq.s32.totalorder %s19, 0
    %p75 = por %p73, %p74
    %p76 = scmp.ne.s32.totalorder %s64, %s65
    %p77 = scmp.eq.s32.totalorder %s20, 1
    %p78 = por %p76, %p77
    %p80 = scmp.ne.s32.totalorder %s65, %s79
    %p81 = scmp.eq.s32.totalorder %s20, 0
    %p82 = por %p80, %p81
    %s84 = sadd.s32 %s83, 1
    %p87 = scmp.eq.s32.totalorder %s14, 1
    %p88 = scmp.ne.s32.totalorder %s83, %s85
    %p89 = scmp.eq.s32.totalorder %s14, 0
    %p90 = por %p88, %p89
    %p91 = scmp.ne.s32.totalorder %s83, %s85
    %p92 = scmp.eq.s32.totalorder %s19, 1
    %p93 = por %p91, %p92
    %p94 = scmp.ne.s32.totalorder %s85, %s86
    %p95 = scmp.eq.s32.totalorder %s19, 0
    %p96 = por %p94, %p95
    %p97 = scmp.ne.s32.totalorder %s85, %s86
    %p98 = scmp.eq.s32.totalorder %s20, 1
    %p99 = por %p97, %p98
    %p101 = scmp.ne.s32.totalorder %s86, %s100
    %p102 = scmp.eq.s32.totalorder %s20, 0
    %p103 = por %p101, %p102
    %s105 = sadd.s32 %s104, 1
    %p108 = scmp.eq.s32.totalorder %s14, 1
    %p109 = scmp.ne.s32.totalorder %s104, %s106
    %p110 = scmp.eq.s32.totalorder %s14, 0
    %p111 = por %p109, %p110
    %p112 = scmp.ne.s32.totalorder %s104, %s106
    %p113 = scmp.eq.s32.totalorder %s19, 1
    %p114 = por %p112, %p113
    %p115 = scmp.ne.s32.totalorder %s106, %s107
    %p116 = scmp.eq.s32.totalorder %s19, 0
    %p117 = por %p115, %p116
    %p118 = scmp.ne.s32.totalorder %s106, %s107
    %p119 = scmp.eq.s32.totalorder %s20, 1
    %p120 = por %p118, %p119
    %p122 = scmp.ne.s32.totalorder %s107, %s121
    %p123 = scmp.eq.s32.totalorder %s20, 0
    %p124 = por %p122, %p123
    %s126 = sadd.s32 %s125, 1
    %p129 = scmp.eq.s32.totalorder %s14, 1
    %p130 = scmp.ne.s32.totalorder %s125, %s127
    %p131 = scmp.eq.s32.totalorder %s14, 0
    %p132 = por %p130, %p131
    %p133 = scmp.ne.s32.totalorder %s125, %s127
    %p134 = scmp.eq.s32.totalorder %s19, 1
    %p135 = por %p133, %p134
    %p136 = scmp.ne.s32.totalorder %s127, %s128
    %p137 = scmp.eq.s32.totalorder %s19, 0
    %p138 = por %p136, %p137
    %p139 = scmp.ne.s32.totalorder %s127, %s128
    %p140 = scmp.eq.s32.totalorder %s20, 1
    %p141 = por %p139, %p140
    %p143 = scmp.ne.s32.totalorder %s128, %s142
    %p144 = scmp.eq.s32.totalorder %s20, 0
    %p145 = por %p143, %p144
    %s147 = sadd.s32 %s146, 1
    %p150 = scmp.eq.s32.totalorder %s14, 1
    %p151 = scmp.ne.s32.totalorder %s146, %s148
    %p152 = scmp.eq.s32.totalorder %s14, 0
    %p153 = por %p151, %p152
    %p154 = scmp.ne.s32.totalorder %s146, %s148
    %p155 = scmp.eq.s32.totalorder %s19, 1
    %p156 = por %p154, %p155
    %p157 = scmp.ne.s32.totalorder %s148, %s149
    %p158 = scmp.eq.s32.totalorder %s19, 0
    %p159 = por %p157, %p158
    %p160 = scmp.ne.s32.totalorder %s148, %s149
    %p161 = scmp.eq.s32.totalorder %s20, 1
    %p162 = por %p160, %p161
    %p164 = scmp.ne.s32.totalorder %s149, %s163
    %p165 = scmp.eq.s32.totalorder %s20, 0
    %p166 = por %p164, %p165
    %s168 = sadd.s32 %s167, 1
    %p171 = scmp.eq.s32.totalorder %s14, 1
    %p172 = scmp.ne.s32.totalorder %s167, %s169
    %p173 = scmp.eq.s32.totalorder %s14, 0
    %p174 = por %p172, %p173
    %p175 = scmp.ne.s32.totalorder %s167, %s169
    %p176 = scmp.eq.s32.totalorder %s19, 1
    %p177 = por %p175, %p176
    %p178 = scmp.ne.s32.totalorder %s169, %s170
    %p179 = scmp.eq.s32.totalorder %s19, 0
    %p180 = por %p178, %p179
    %p181 = scmp.ne.s32.totalorder %s169, %s170
    %p182 = scmp.eq.s32.totalorder %s20, 1
    %p183 = por %p181, %p182
    %p185 = scmp.ne.s32.totalorder %s170, %s184
    %p186 = scmp.eq.s32.totalorder %s20, 0
    %p187 = por %p185, %p186
    %s189 = sadd.s32 %s188, 1
    %p192 = scmp.eq.s32.totalorder %s14, 1
    %p193 = scmp.ne.s32.totalorder %s188, %s190
    %p194 = scmp.eq.s32.totalorder %s14, 0
    %p195 = por %p193, %p194
    %p196 = scmp.ne.s32.totalorder %s188, %s190
    %p197 = scmp.eq.s32.totalorder %s19, 1
    %p198 = por %p196, %p197
    %p199 = scmp.ne.s32.totalorder %s190, %s191
    %p200 = scmp.eq.s32.totalorder %s19, 0
    %p201 = por %p199, %p200
    %p202 = scmp.ne.s32.totalorder %s190, %s191
    %p203 = scmp.eq.s32.totalorder %s20, 1
    %p204 = por %p202, %p203
    %p206 = scmp.ne.s32.totalorder %s191, %s205
    %p207 = scmp.eq.s32.totalorder %s20, 0
    %p208 = por %p206, %p207
    %s209 = ssub.s32 %s21, %s33
    %p210 = scmp.eq.s32.totalorder %s209, 0
    %s212 = sadd.s32 %s211, 1
    %s213 = scalar_select %p210, %s211, %s212
    %p216 = pneg %p210
    %p217 = scmp.eq.s32.totalorder %s14, 1
    %p218 = por %p216, %p217
    %p219 = scmp.ne.s32.totalorder %s211, %s214
    %p220 = scmp.eq.s32.totalorder %s14, 0
    %p221 = por %p219, %p220
    %p222 = scmp.ne.s32.totalorder %s211, %s214
    %p223 = scmp.eq.s32.totalorder %s19, 1
    %p224 = por %p222, %p223
    %p225 = scmp.ne.s32.totalorder %s214, %s215
    %p226 = scmp.eq.s32.totalorder %s19, 0
    %p227 = por %p225, %p226
    %p228 = scmp.ne.s32.totalorder %s214, %s215
    %p229 = scmp.eq.s32.totalorder %s20, 1
    %p230 = por %p228, %p229
    %p232 = scmp.ne.s32.totalorder %s215, %s231
    %p233 = scmp.eq.s32.totalorder %s20, 0
    %p234 = por %p232, %p233
    %p235 = scmp.le.s32.totalorder 1, %s14
    %p236 = scmp.lt.s32.totalorder %s14, 3
    %p237 = pnand %p235, %p236
    %p238 = pneg %p237
    // Predicated region
    $region9: #{gnn_lp_forward.3} parent=5 // pred_check
      _
    $region10: #{gnn_lp_forward.3} parent=5 // pred_check_branch
      %240 = sbr.rel (%p237) target = $region12
    $region11: #{gnn_lp_forward.3} parent=5 // pred_region
      %s241 = ssub.s32 %s14, 1
      // Predicated region
      $region13: #{gnn_lp_forward.3} parent=11 // pred_check
        %p242 = pneg %p75
      $region14: #{gnn_lp_forward.3} parent=11 // pred_check_branch
        %244 = sbr.rel (%p242) target = $region16
      $region15: #{gnn_lp_forward.3} parent=11 // pred_region
        _
      $region16: #{gnn_lp_forward.3} parent=11 // pred_fallthru
        _
      // Predicated region
      $region17: #{gnn_lp_forward.3} parent=11 // pred_check
        %p245 = pneg %p96
      $region18: #{gnn_lp_forward.3} parent=11 // pred_check_branch
        %247 = sbr.rel (%p245) target = $region20
      $region19: #{gnn_lp_forward.3} parent=11 // pred_region
        _
      $region20: #{gnn_lp_forward.3} parent=11 // pred_fallthru
        _
      // Predicated region
      $region21: #{gnn_lp_forward.3} parent=11 // pred_check
        %p248 = pneg %p117
      $region22: #{gnn_lp_forward.3} parent=11 // pred_check_branch
        %250 = sbr.rel (%p248) target = $region24
      $region23: #{gnn_lp_forward.3} parent=11 // pred_region
        _
      $region24: #{gnn_lp_forward.3} parent=11 // pred_fallthru
        _
      // Predicated region
      $region25: #{gnn_lp_forward.3} parent=11 // pred_check
        %p251 = pneg %p138
      $region26: #{gnn_lp_forward.3} parent=11 // pred_check_branch
        %253 = sbr.rel (%p251) target = $region28
      $region27: #{gnn_lp_forward.3} parent=11 // pred_region
        _
      $region28: #{gnn_lp_forward.3} parent=11 // pred_fallthru
        _
      // Predicated region
      $region29: #{gnn_lp_forward.3} parent=11 // pred_check
        %p254 = pneg %p159
      $region30: #{gnn_lp_forward.3} parent=11 // pred_check_branch
        %256 = sbr.rel (%p254) target = $region32
      $region31: #{gnn_lp_forward.3} parent=11 // pred_region
        _
      $region32: #{gnn_lp_forward.3} parent=11 // pred_fallthru
        _
      // Predicated region
      $region33: #{gnn_lp_forward.3} parent=11 // pred_check
        %p257 = pneg %p180
      $region34: #{gnn_lp_forward.3} parent=11 // pred_check_branch
        %259 = sbr.rel (%p257) target = $region36
      $region35: #{gnn_lp_forward.3} parent=11 // pred_region
        _
      $region36: #{gnn_lp_forward.3} parent=11 // pred_fallthru
        _
      // Predicated region
      $region37: #{gnn_lp_forward.3} parent=11 // pred_check
        %p260 = pneg %p201
      $region38: #{gnn_lp_forward.3} parent=11 // pred_check_branch
        %262 = sbr.rel (%p260) target = $region40
      $region39: #{gnn_lp_forward.3} parent=11 // pred_region
        _
      $region40: #{gnn_lp_forward.3} parent=11 // pred_fallthru
        _
    $region12: #{gnn_lp_forward.3} parent=5 // pred_fallthru
      _
    %p263 = scmp.lt.s32.totalorder %s14, 2
    // Predicated region
    $region41: #{gnn_lp_forward.3} parent=5 // pred_check
      %p264 = pneg %p263
    $region42: #{gnn_lp_forward.3} parent=5 // pred_check_branch
      %266 = sbr.rel (%p264) target = $region44
    $region43: #{gnn_lp_forward.3} parent=5 // pred_region
      // Predicated region
      $region45: #{gnn_lp_forward.3} parent=43 // pred_check
        %p267 = pneg %p48
      $region46: #{gnn_lp_forward.3} parent=43 // pred_check_branch
        %269 = sbr.rel (%p267) target = $region48
      $region47: #{gnn_lp_forward.3} parent=43 // pred_region
        %s270 = smul.u32 16, %s21
        %s271 = smul.u32 2, %s22
        %p272 = scmp.lt.s32.totalorder %s270, 31
        %s273 = scalar_select %p272, %s270, 31
        %p274 = scmp.lt.s32.totalorder %s271, 1
        %s275 = scalar_select %p274, %s271, 1
        %s276 = smul.addr %s273, 2
        %s277 = sadd.s32 %s275, %s276
        %s278 = smul.addr %s277, 2
        %s279 = scalar_lea.vmem %s0, %s278
        %s280 = smul.u32 16, %s21
        %s281 = smul.u32 2, %s22
      $region48: #{gnn_lp_forward.3} parent=43 // pred_fallthru
        _
    $region44: #{gnn_lp_forward.3} parent=5 // pred_fallthru
      _
    %p282 = scmp.le.s32.totalorder 1, %s14
    %p283 = scmp.lt.s32.totalorder %s14, 3
    %p284 = pnand %p282, %p283
    %p285 = pneg %p284
    // Predicated region
    $region49: #{gnn_lp_forward.3} parent=5 // pred_check
      _
    $region50: #{gnn_lp_forward.3} parent=5 // pred_check_branch
      %287 = sbr.rel (%p284) target = $region52
    $region51: #{gnn_lp_forward.3} parent=5 // pred_region
      %s288 = ssub.s32 %s14, 1
      %s289 = smul.u32 16, %s23
      %s290 = smul.u32 2, %s24
      %p291 = scmp.lt.s32.totalorder %s289, 31
      %s292 = scalar_select %p291, %s289, 31
      %p293 = scmp.lt.s32.totalorder %s290, 1
      %s294 = scalar_select %p293, %s290, 1
      %s295 = smul.addr %s292, 2
      %s296 = sadd.s32 %s294, %s295
      %s297 = smul.addr %s296, 2
      %s298 = scalar_lea.vmem %s0, %s297
      %p299 = pneg %p54
      %p300 = pneg %p51
      %p301 = pneg %p75
      %p302 = pneg %p72
      %p303 = pneg %p96
      %p304 = pneg %p93
      %p305 = pneg %p117
      %p306 = pneg %p114
      %p307 = pneg %p138
      %p308 = pneg %p135
      %p309 = pneg %p159
      %p310 = pneg %p156
      %p311 = pneg %p180
      %p312 = pneg %p177
      %p313 = pneg %p201
      %p314 = pneg %p198
      %p315 = pneg %p227
      %p316 = pneg %p224
      %s317 = smul.u32 16, %s23
      %p318 = scmp.lt.s32.totalorder %s317, 31
      %s319 = scalar_select %p318, %s317, 31
      %s320 = smul.addr %s319, 4
      %s321 = scalar_lea.vmem %s8, %s320
      %s322 = smul.u32 16, %s23
      %s323 = smul.u32 2, %s24
      %p324 = scmp.lt.s32.totalorder %s322, 31
      %s325 = scalar_select %p324, %s322, 31
      %p326 = scmp.lt.s32.totalorder %s323, 1
      %s327 = scalar_select %p326, %s323, 1
      %s328 = smul.addr %s325, 2
      %s329 = sadd.s32 %s327, %s328
      %s330 = smul.addr %s329, 2
      %s331 = scalar_lea.vmem %s0, %s330
      %s332 = smul.u32 16, %s23
      %s333 = smul.u32 2, %s24
      %s334 = smul.u32 16, %s23
      %p335 = scmp.lt.s32.totalorder %s334, 31
      %s336 = scalar_select %p335, %s334, 31
      %s337 = smul.addr %s336, 4
      %s338 = scalar_lea.vmem %s8, %s337
      %s339 = smul.u32 16, %s23
      %p341 = scmp.eq.s32.totalorder %s24, 0
      // Predicated region
      $region53: #{gnn_lp_forward.3} parent=51 // pred_check
        %p342 = pneg %p341
      $region54: #{gnn_lp_forward.3} parent=51 // pred_check_branch
        %344 = sbr.rel (%p342) target = $region56
      $region55: #{gnn_lp_forward.3} parent=51 // pred_region
        %345 = vst [vmem:[#allocation2] sm:$0xff] 0.0
        %346 = vst [vmem:[#allocation2 + $0x8] sm:$0xff] 0.0
        %347 = vst [vmem:[#allocation2 + $0x10] sm:$0xff] 0.0
        %348 = vst [vmem:[#allocation2 + $0x18] sm:$0xff] 0.0
        %349 = vst [vmem:[#allocation2 + $0x20] sm:$0xff] 0.0
        %350 = vst [vmem:[#allocation2 + $0x28] sm:$0xff] 0.0
        %351 = vst [vmem:[#allocation2 + $0x30] sm:$0xff] 0.0
        %352 = vst [vmem:[#allocation2 + $0x38] sm:$0xff] 0.0
        %353 = vst [vmem:[#allocation2 + $0x40] sm:$0xff] 0.0
        %354 = vst [vmem:[#allocation2 + $0x48] sm:$0xff] 0.0
        %355 = vst [vmem:[#allocation2 + $0x50] sm:$0xff] 0.0
        %356 = vst [vmem:[#allocation2 + $0x58] sm:$0xff] 0.0
        %357 = vst [vmem:[#allocation2 + $0x60] sm:$0xff] 0.0
        %358 = vst [vmem:[#allocation2 + $0x68] sm:$0xff] 0.0
        %359 = vst [vmem:[#allocation2 + $0x70] sm:$0xff] 0.0
        %360 = vst [vmem:[#allocation2 + $0x78] sm:$0xff] 0.0
      $region56: #{gnn_lp_forward.3} parent=51 // pred_fallthru
        _
      %v361 = vld [vmem:[%s331] sm:$0xf]
      %v362 = vld [vmem:[%s331 + $0x4] sm:$0xf]
      %v363 = vld [vmem:[%s331 + $0x8] sm:$0xf]
      %v364 = vld [vmem:[%s331 + $0xc] sm:$0xf]
      %v365 = vld [vmem:[%s331 + $0x10] sm:$0xf]
      %v366 = vld [vmem:[%s331 + $0x14] sm:$0xf]
      %v367 = vld [vmem:[%s331 + $0x18] sm:$0xf]
      %v368 = vld [vmem:[%s331 + $0x1c] sm:$0xf]
      %v369 = vld [vmem:[%s331 + $0x20] sm:$0xf]
      %v370 = vld [vmem:[%s331 + $0x24] sm:$0xf]
      %v371 = vld [vmem:[%s331 + $0x28] sm:$0xf]
      %v372 = vld [vmem:[%s331 + $0x2c] sm:$0xf]
      %v373 = vld [vmem:[%s331 + $0x30] sm:$0xf]
      %v374 = vld [vmem:[%s331 + $0x34] sm:$0xf]
      %v375 = vld [vmem:[%s331 + $0x38] sm:$0xf]
      %v376 = vld [vmem:[%s331 + $0x3c] sm:$0xf]
      %v377 = vunpack.c.l.s8.bf16 %v361
      %v378 = vunpack.c.l.s8.bf16 %v362
      %v379 = vunpack.c.l.s8.bf16 %v363
      %v380 = vunpack.c.l.s8.bf16 %v364
      %v381 = vunpack.c.l.s8.bf16 %v365
      %v382 = vunpack.c.l.s8.bf16 %v366
      %v383 = vunpack.c.l.s8.bf16 %v367
      %v384 = vunpack.c.l.s8.bf16 %v368
      %v385 = vunpack.c.l.s8.bf16 %v369
      %v386 = vunpack.c.l.s8.bf16 %v370
      %v387 = vunpack.c.l.s8.bf16 %v371
      %v388 = vunpack.c.l.s8.bf16 %v372
      %v389 = vunpack.c.l.s8.bf16 %v373
      %v390 = vunpack.c.l.s8.bf16 %v374
      %v391 = vunpack.c.l.s8.bf16 %v375
      %v392 = vunpack.c.l.s8.bf16 %v376
      %s393 = smul.u32 %s24, 256
      %s394 = sshra.s32 %s393, 3
      %s395 = sand.u32 %s393, 7
      %s396 = smul.addr %s394, 4
      %s397 = scalar_lea.vmem %s1, %s396
      %v398 = vld [vmem:[%s397] sm:$0xf]
      %v399 = vld [vmem:[%s397 + $0x4] sm:$0xf]
      %v400 = vld [vmem:[%s397 + $0x8] sm:$0xf]
      %v401 = vld [vmem:[%s397 + $0xc] sm:$0xf]
      %v402 = vld [vmem:[%s397 + $0x10] sm:$0xf]
      %v403 = vld [vmem:[%s397 + $0x14] sm:$0xf]
      %v404 = vld [vmem:[%s397 + $0x18] sm:$0xf]
      %v405 = vld [vmem:[%s397 + $0x1c] sm:$0xf]
      %v406 = vld [vmem:[%s397 + $0x20] sm:$0xf]
      %v407 = vld [vmem:[%s397 + $0x24] sm:$0xf]
      %v408 = vld [vmem:[%s397 + $0x28] sm:$0xf]
      %v409 = vld [vmem:[%s397 + $0x2c] sm:$0xf]
      %v410 = vld [vmem:[%s397 + $0x30] sm:$0xf]
      %v411 = vld [vmem:[%s397 + $0x34] sm:$0xf]
      %v412 = vld [vmem:[%s397 + $0x38] sm:$0xf]
      %v413 = vld [vmem:[%s397 + $0x3c] sm:$0xf]
      %v414 = vld [vmem:[%s397 + $0x40] sm:$0xf]
      %v415 = vld [vmem:[%s397 + $0x44] sm:$0xf]
      %v416 = vld [vmem:[%s397 + $0x48] sm:$0xf]
      %v417 = vld [vmem:[%s397 + $0x4c] sm:$0xf]
      %v418 = vld [vmem:[%s397 + $0x50] sm:$0xf]
      %v419 = vld [vmem:[%s397 + $0x54] sm:$0xf]
      %v420 = vld [vmem:[%s397 + $0x58] sm:$0xf]
      %v421 = vld [vmem:[%s397 + $0x5c] sm:$0xf]
      %v422 = vld [vmem:[%s397 + $0x60] sm:$0xf]
      %v423 = vld [vmem:[%s397 + $0x64] sm:$0xf]
      %v424 = vld [vmem:[%s397 + $0x68] sm:$0xf]
      %v425 = vld [vmem:[%s397 + $0x6c] sm:$0xf]
      %v426 = vld [vmem:[%s397 + $0x70] sm:$0xf]
      %v427 = vld [vmem:[%s397 + $0x74] sm:$0xf]
      %v428 = vld [vmem:[%s397 + $0x78] sm:$0xf]
      %v429 = vld [vmem:[%s397 + $0x7c] sm:$0xf]
      %v430 = vld [vmem:[#allocation2] sm:$0xff]
      %v431 = vld [vmem:[#allocation2 + $0x8] sm:$0xff]
      %v432 = vld [vmem:[#allocation2 + $0x10] sm:$0xff]
      %v433 = vld [vmem:[#allocation2 + $0x18] sm:$0xff]
      %v434 = vld [vmem:[#allocation2 + $0x20] sm:$0xff]
      %v435 = vld [vmem:[#allocation2 + $0x28] sm:$0xff]
      %v436 = vld [vmem:[#allocation2 + $0x30] sm:$0xff]
      %v437 = vld [vmem:[#allocation2 + $0x38] sm:$0xff]
      %v438 = vld [vmem:[#allocation2 + $0x40] sm:$0xff]
      %v439 = vld [vmem:[#allocation2 + $0x48] sm:$0xff]
      %v440 = vld [vmem:[#allocation2 + $0x50] sm:$0xff]
      %v441 = vld [vmem:[#allocation2 + $0x58] sm:$0xff]
      %v442 = vld [vmem:[#allocation2 + $0x60] sm:$0xff]
      %v443 = vld [vmem:[#allocation2 + $0x68] sm:$0xff]
      %v444 = vld [vmem:[#allocation2 + $0x70] sm:$0xff]
      %v445 = vld [vmem:[#allocation2 + $0x78] sm:$0xff]
      %v462 = vunpack.c.l.b16 %v377
      %v463 = vunpack.c.h.b16 %v377
      %v464 = vunpack.c.l.b16 %v378
      %v465 = vunpack.c.h.b16 %v378
      %v466 = vunpack.c.l.b16 %v379
      %v467 = vunpack.c.h.b16 %v379
      %v468 = vunpack.c.l.b16 %v380
      %v469 = vunpack.c.h.b16 %v380
      %v470 = vunpack.c.l.b16 %v381
      %v471 = vunpack.c.h.b16 %v381
      %v472 = vunpack.c.l.b16 %v382
      %v473 = vunpack.c.h.b16 %v382
      %v474 = vunpack.c.l.b16 %v383
      %v475 = vunpack.c.h.b16 %v383
      %v476 = vunpack.c.l.b16 %v384
      %v477 = vunpack.c.h.b16 %v384
      %v478 = vunpack.c.l.b16 %v385
      %v479 = vunpack.c.h.b16 %v385
      %v480 = vunpack.c.l.b16 %v386
      %v481 = vunpack.c.h.b16 %v386
      %v482 = vunpack.c.l.b16 %v387
      %v483 = vunpack.c.h.b16 %v387
      %v484 = vunpack.c.l.b16 %v388
      %v485 = vunpack.c.h.b16 %v388
      %v486 = vunpack.c.l.b16 %v389
      %v487 = vunpack.c.h.b16 %v389
      %v488 = vunpack.c.l.b16 %v390
      %v489 = vunpack.c.h.b16 %v390
      %v490 = vunpack.c.l.b16 %v391
      %v491 = vunpack.c.h.b16 %v391
      %v492 = vunpack.c.l.b16 %v392
      %v493 = vunpack.c.h.b16 %v392
      %v494 = vpack.c.b16 %v464, %v462
      %v495 = vpack.c.b16 %v465, %v463
      %v496 = vpack.c.b16 %v468, %v466
      %v497 = vpack.c.b16 %v469, %v467
      %v498 = vpack.c.b16 %v472, %v470
      %v499 = vpack.c.b16 %v473, %v471
      %v500 = vpack.c.b16 %v476, %v474
      %v501 = vpack.c.b16 %v477, %v475
      %v502 = vpack.c.b16 %v480, %v478
      %v503 = vpack.c.b16 %v481, %v479
      %v504 = vpack.c.b16 %v484, %v482
      %v505 = vpack.c.b16 %v485, %v483
      %v506 = vpack.c.b16 %v488, %v486
      %v507 = vpack.c.b16 %v489, %v487
      %v508 = vpack.c.b16 %v492, %v490
      %v509 = vpack.c.b16 %v493, %v491
      %v558 = vunpack.c.l.b16 %v398
      %v559 = vunpack.c.l.b16 %v399
      %v560 = vunpack.c.l.b16 %v400
      %v561 = vunpack.c.l.b16 %v401
      %v562 = vunpack.c.l.b16 %v402
      %v563 = vunpack.c.l.b16 %v403
      %v564 = vunpack.c.l.b16 %v404
      %v565 = vunpack.c.l.b16 %v405
      %v566 = vunpack.c.l.b16 %v406
      %v567 = vunpack.c.l.b16 %v407
      %v568 = vunpack.c.l.b16 %v408
      %v569 = vunpack.c.l.b16 %v409
      %v570 = vunpack.c.l.b16 %v410
      %v571 = vunpack.c.l.b16 %v411
      %v572 = vunpack.c.l.b16 %v412
      %v573 = vunpack.c.l.b16 %v413
      %v574 = vunpack.c.l.b16 %v414
      %v575 = vunpack.c.l.b16 %v415
      %v576 = vunpack.c.l.b16 %v416
      %v577 = vunpack.c.l.b16 %v417
      %v578 = vunpack.c.l.b16 %v418
      %v579 = vunpack.c.l.b16 %v419
      %v580 = vunpack.c.l.b16 %v420
      %v581 = vunpack.c.l.b16 %v421
      %v582 = vunpack.c.l.b16 %v422
      %v583 = vunpack.c.l.b16 %v423
      %v584 = vunpack.c.l.b16 %v424
      %v585 = vunpack.c.l.b16 %v425
      %v586 = vunpack.c.l.b16 %v426
      %v587 = vunpack.c.l.b16 %v427
      %v588 = vunpack.c.l.b16 %v428
      %v589 = vunpack.c.l.b16 %v429
      %v590 = vpack.c.b16 %v559, %v558
      %v591 = vpack.c.b16 %v561, %v560
      %v592 = vpack.c.b16 %v563, %v562
      %v593 = vpack.c.b16 %v565, %v564
      %v594 = vpack.c.b16 %v567, %v566
      %v595 = vpack.c.b16 %v569, %v568
      %v596 = vpack.c.b16 %v571, %v570
      %v597 = vpack.c.b16 %v573, %v572
      %v598 = vpack.c.b16 %v575, %v574
      %v599 = vpack.c.b16 %v577, %v576
      %v600 = vpack.c.b16 %v579, %v578
      %v601 = vpack.c.b16 %v581, %v580
      %v602 = vpack.c.b16 %v583, %v582
      %v603 = vpack.c.b16 %v585, %v584
      %v604 = vpack.c.b16 %v587, %v586
      %v605 = vpack.c.b16 %v589, %v588
      %622 = vmatprep.subr.bf16.mxu0 0
      %623 = vmatpush1.bf16.msra.mxu0 %v597
      %624 = vmatprep.subr.bf16.mxu0 0
      %625 = vmatpush1.bf16.msra.mxu0 %v596
      %626 = vmatprep.subr.bf16.mxu0 0
      %627 = vmatpush1.bf16.msra.mxu0 %v595
      %628 = vmatprep.subr.bf16.mxu0 0
      %629 = vmatpush1.bf16.msra.mxu0 %v594
      %630 = vmatprep.subr.bf16.mxu0 0
      %631 = vmatpush1.bf16.msra.mxu0 %v593
      %632 = vmatprep.subr.bf16.mxu0 0
      %633 = vmatpush1.bf16.msra.mxu0 %v592
      %634 = vmatprep.subr.bf16.mxu0 0
      %635 = vmatpush1.bf16.msra.mxu0 %v591
      %636 = vmatprep.subr.bf16.mxu0 0
      %637 = vmatpush1.bf16.msra.mxu0 %v590
      %638 = vmatprep.subr.bf16.mxu0 0
      %639 = vmatpush2.bf16.msra.mxu0 %v605
      %640 = vmatprep.subr.bf16.mxu0 0
      %641 = vmatpush2.bf16.msra.mxu0 %v604
      %642 = vmatprep.subr.bf16.mxu0 0
      %643 = vmatpush2.bf16.msra.mxu0 %v603
      %644 = vmatprep.subr.bf16.mxu0 0
      %645 = vmatpush2.bf16.msra.mxu0 %v602
      %646 = vmatprep.subr.bf16.mxu0 0
      %647 = vmatpush2.bf16.msra.mxu0 %v601
      %648 = vmatprep.subr.bf16.mxu0 0
      %649 = vmatpush2.bf16.msra.mxu0 %v600
      %650 = vmatprep.subr.bf16.mxu0 0
      %651 = vmatpush2.bf16.msra.mxu0 %v599
      %652 = vmatprep.subr.bf16.mxu0 0
      %653 = vmatpush2.bf16.msra.mxu0 %v598
      %654 = vmatprep.mubr.bf16.mxu0 %v495
      %655 = vmatmul.mubr.bf16.gmra.mxu0 %v494
      %v656 = vpop.f32.mrf.mxu0
      %v657 = vadd.f32 0.0, %v656
      %v658 = vpop.f32.mrf.mxu0
      %v659 = vpop.f32.mrf.mxu0
      %v660 = vadd.f32 0.0, %v659
      %v661 = vpop.f32.mrf.mxu0
      %662 = vmatprep.mubr.bf16.mxu0 %v497
      %663 = vmatmul.mubr.bf16.gmra.mxu0 %v496
      %v664 = vpop.f32.mrf.mxu0
      %v665 = vadd.f32 0.0, %v664
      %v666 = vpop.f32.mrf.mxu0
      %v667 = vpop.f32.mrf.mxu0
      %v668 = vadd.f32 0.0, %v667
      %v669 = vpop.f32.mrf.mxu0
      %670 = vmatprep.mubr.bf16.mxu0 %v499
      %671 = vmatmul.mubr.bf16.gmra.mxu0 %v498
      %v672 = vpop.f32.mrf.mxu0
      %v673 = vadd.f32 0.0, %v672
      %v674 = vpop.f32.mrf.mxu0
      %v675 = vpop.f32.mrf.mxu0
      %v676 = vadd.f32 0.0, %v675
      %v677 = vpop.f32.mrf.mxu0
      %678 = vmatprep.mubr.bf16.mxu0 %v501
      %679 = vmatmul.mubr.bf16.gmra.mxu0 %v500
      %v680 = vpop.f32.mrf.mxu0
      %v681 = vadd.f32 0.0, %v680
      %v682 = vpop.f32.mrf.mxu0
      %v683 = vpop.f32.mrf.mxu0
      %v684 = vadd.f32 0.0, %v683
      %v685 = vpop.f32.mrf.mxu0
      %686 = vmatprep.mubr.bf16.mxu0 %v503
      %687 = vmatmul.mubr.bf16.gmra.mxu0 %v502
      %v688 = vpop.f32.mrf.mxu0
      %v689 = vadd.f32 0.0, %v688
      %v690 = vpop.f32.mrf.mxu0
      %v691 = vpop.f32.mrf.mxu0
      %v692 = vadd.f32 0.0, %v691
      %v693 = vpop.f32.mrf.mxu0
      %694 = vmatprep.mubr.bf16.mxu0 %v505
      %695 = vmatmul.mubr.bf16.gmra.mxu0 %v504
      %v696 = vpop.f32.mrf.mxu0
      %v697 = vadd.f32 0.0, %v696
      %v698 = vpop.f32.mrf.mxu0
      %v699 = vpop.f32.mrf.mxu0
      %v700 = vadd.f32 0.0, %v699
      %v701 = vpop.f32.mrf.mxu0
      %702 = vmatprep.mubr.bf16.mxu0 %v507
      %703 = vmatmul.mubr.bf16.gmra.mxu0 %v506
      %v704 = vpop.f32.mrf.mxu0
      %v705 = vadd.f32 0.0, %v704
      %v706 = vpop.f32.mrf.mxu0
      %v707 = vpop.f32.mrf.mxu0
      %v708 = vadd.f32 0.0, %v707
      %v709 = vpop.f32.mrf.mxu0
      %710 = vmatprep.mubr.bf16.mxu0 %v509
      %711 = vmatmul.mubr.bf16.gmra.mxu0 %v508
      %v712 = vpop.f32.mrf.mxu0
      %v713 = vadd.f32 0.0, %v712
      %v714 = vpop.f32.mrf.mxu0
      %v715 = vpop.f32.mrf.mxu0
      %v716 = vadd.f32 0.0, %v715
      %v717 = vpop.f32.mrf.mxu0
      %718 = vdwg.mxu0
      %v719 = vadd.f32 %v430, %v657
      %v720 = vadd.f32 %v431, %v660
      %v721 = vadd.f32 %v432, %v665
      %v722 = vadd.f32 %v433, %v668
      %v723 = vadd.f32 %v434, %v673
      %v724 = vadd.f32 %v435, %v676
      %v725 = vadd.f32 %v436, %v681
      %v726 = vadd.f32 %v437, %v684
      %v727 = vadd.f32 %v438, %v689
      %v728 = vadd.f32 %v439, %v692
      %v729 = vadd.f32 %v440, %v697
      %v730 = vadd.f32 %v441, %v700
      %v731 = vadd.f32 %v442, %v705
      %v732 = vadd.f32 %v443, %v708
      %v733 = vadd.f32 %v444, %v713
      %v734 = vadd.f32 %v445, %v716
      %735 = vst [vmem:[#allocation2] sm:$0xff] %v719
      %736 = vst [vmem:[#allocation2 + $0x8] sm:$0xff] %v720
      %737 = vst [vmem:[#allocation2 + $0x10] sm:$0xff] %v721
      %738 = vst [vmem:[#allocation2 + $0x18] sm:$0xff] %v722
      %739 = vst [vmem:[#allocation2 + $0x20] sm:$0xff] %v723
      %740 = vst [vmem:[#allocation2 + $0x28] sm:$0xff] %v724
      %741 = vst [vmem:[#allocation2 + $0x30] sm:$0xff] %v725
      %742 = vst [vmem:[#allocation2 + $0x38] sm:$0xff] %v726
      %743 = vst [vmem:[#allocation2 + $0x40] sm:$0xff] %v727
      %744 = vst [vmem:[#allocation2 + $0x48] sm:$0xff] %v728
      %745 = vst [vmem:[#allocation2 + $0x50] sm:$0xff] %v729
      %746 = vst [vmem:[#allocation2 + $0x58] sm:$0xff] %v730
      %747 = vst [vmem:[#allocation2 + $0x60] sm:$0xff] %v731
      %748 = vst [vmem:[#allocation2 + $0x68] sm:$0xff] %v732
      %749 = vst [vmem:[#allocation2 + $0x70] sm:$0xff] %v733
      %750 = vst [vmem:[#allocation2 + $0x78] sm:$0xff] %v734
      // Predicated region
      $region57: #{gnn_lp_forward.3} parent=51 // pred_check
        %p751 = pneg %p341
      $region58: #{gnn_lp_forward.3} parent=51 // pred_check_branch
        %753 = sbr.rel (%p751) target = $region60
      $region59: #{gnn_lp_forward.3} parent=51 // pred_region
        %v754 = vld [vmem:[#allocation2] sm:$0xff]
        %v755 = vld [vmem:[#allocation2 + $0x8] sm:$0xff]
        %v756 = vld [vmem:[#allocation2 + $0x10] sm:$0xff]
        %v757 = vld [vmem:[#allocation2 + $0x18] sm:$0xff]
        %v758 = vld [vmem:[#allocation2 + $0x20] sm:$0xff]
        %v759 = vld [vmem:[#allocation2 + $0x28] sm:$0xff]
        %v760 = vld [vmem:[#allocation2 + $0x30] sm:$0xff]
        %v761 = vld [vmem:[#allocation2 + $0x38] sm:$0xff]
        %v762 = vld [vmem:[#allocation2 + $0x40] sm:$0xff]
        %v763 = vld [vmem:[#allocation2 + $0x48] sm:$0xff]
        %v764 = vld [vmem:[#allocation2 + $0x50] sm:$0xff]
        %v765 = vld [vmem:[#allocation2 + $0x58] sm:$0xff]
        %v766 = vld [vmem:[#allocation2 + $0x60] sm:$0xff]
        %v767 = vld [vmem:[#allocation2 + $0x68] sm:$0xff]
        %v768 = vld [vmem:[#allocation2 + $0x70] sm:$0xff]
        %v769 = vld [vmem:[#allocation2 + $0x78] sm:$0xff]
        %v770 = vpack.c.bf16 %v755, %v754
        %v771 = vpack.c.bf16 %v757, %v756
        %v772 = vpack.c.bf16 %v759, %v758
        %v773 = vpack.c.bf16 %v761, %v760
        %v774 = vpack.c.bf16 %v763, %v762
        %v775 = vpack.c.bf16 %v765, %v764
        %v776 = vpack.c.bf16 %v767, %v766
        %v777 = vpack.c.bf16 %v769, %v768
        %v778 = vld [vmem:[%s2] sm:$0xf]
        %v779 = vld [vmem:[%s2 + $0x4] sm:$0xf]
        %v780 = vld [vmem:[%s2 + $0x8] sm:$0xf]
        %v781 = vld [vmem:[%s2 + $0xc] sm:$0xf]
        %v782 = vld [vmem:[%s2 + $0x10] sm:$0xf]
        %v783 = vld [vmem:[%s2 + $0x14] sm:$0xf]
        %v784 = vld [vmem:[%s2 + $0x18] sm:$0xf]
        %v785 = vld [vmem:[%s2 + $0x1c] sm:$0xf]
        %v786 = vld [vmem:[%s2 + $0x20] sm:$0xf]
        %v787 = vld [vmem:[%s2 + $0x24] sm:$0xf]
        %v788 = vld [vmem:[%s2 + $0x28] sm:$0xf]
        %v789 = vld [vmem:[%s2 + $0x2c] sm:$0xf]
        %v790 = vld [vmem:[%s2 + $0x30] sm:$0xf]
        %v791 = vld [vmem:[%s2 + $0x34] sm:$0xf]
        %v792 = vld [vmem:[%s2 + $0x38] sm:$0xf]
        %v793 = vld [vmem:[%s2 + $0x3c] sm:$0xf]
        %v794 = vld [vmem:[%s3] sm:$0x1]
        %v796 = vlaneseq
        %v797 = vshrl.u32 %v796, 7
        %v798 = vsub.s32 0, %v797
        %v799 = vrot.slane %v794, %v798
        %v817 = vunpack.c.l.b16 %v778
        %v818 = vunpack.c.l.b16 %v779
        %v819 = vunpack.c.l.b16 %v780
        %v820 = vunpack.c.l.b16 %v781
        %v821 = vunpack.c.l.b16 %v782
        %v822 = vunpack.c.l.b16 %v783
        %v823 = vunpack.c.l.b16 %v784
        %v824 = vunpack.c.l.b16 %v785
        %v825 = vunpack.c.l.b16 %v786
        %v826 = vunpack.c.l.b16 %v787
        %v827 = vunpack.c.l.b16 %v788
        %v828 = vunpack.c.l.b16 %v789
        %v829 = vunpack.c.l.b16 %v790
        %v830 = vunpack.c.l.b16 %v791
        %v831 = vunpack.c.l.b16 %v792
        %v832 = vunpack.c.l.b16 %v793
        %v833 = vpack.c.b16 %v818, %v817
        %v834 = vpack.c.b16 %v820, %v819
        %v835 = vpack.c.b16 %v822, %v821
        %v836 = vpack.c.b16 %v824, %v823
        %v837 = vpack.c.b16 %v826, %v825
        %v838 = vpack.c.b16 %v828, %v827
        %v839 = vpack.c.b16 %v830, %v829
        %v840 = vpack.c.b16 %v832, %v831
        %849 = vmatprep.subr.bf16.mxu0 0
        %850 = vmatpush1.bf16.msra.mxu0 %v840
        %851 = vmatprep.subr.bf16.mxu0 0
        %852 = vmatpush1.bf16.msra.mxu0 %v839
        %853 = vmatprep.subr.bf16.mxu0 0
        %854 = vmatpush1.bf16.msra.mxu0 %v838
        %855 = vmatprep.subr.bf16.mxu0 0
        %856 = vmatpush1.bf16.msra.mxu0 %v837
        %857 = vmatprep.subr.bf16.mxu0 0
        %858 = vmatpush1.bf16.msra.mxu0 %v836
        %859 = vmatprep.subr.bf16.mxu0 0
        %860 = vmatpush1.bf16.msra.mxu0 %v835
        %861 = vmatprep.subr.bf16.mxu0 0
        %862 = vmatpush1.bf16.msra.mxu0 %v834
        %863 = vmatprep.subr.bf16.mxu0 0
        %864 = vmatpush1.bf16.msra.mxu0 %v833
        %865 = vmatprep.subr.bf16.mxu0 0
        %866 = vmatpush2.bf16.msra.mxu0 0
        %867 = vmatprep.subr.bf16.mxu0 0
        %868 = vmatpush2.bf16.msra.mxu0 0
        %869 = vmatprep.subr.bf16.mxu0 0
        %870 = vmatpush2.bf16.msra.mxu0 0
        %871 = vmatprep.subr.bf16.mxu0 0
        %872 = vmatpush2.bf16.msra.mxu0 0
        %873 = vmatprep.subr.bf16.mxu0 0
        %874 = vmatpush2.bf16.msra.mxu0 0
        %875 = vmatprep.subr.bf16.mxu0 0
        %876 = vmatpush2.bf16.msra.mxu0 0
        %877 = vmatprep.subr.bf16.mxu0 0
        %878 = vmatpush2.bf16.msra.mxu0 0
        %879 = vmatprep.subr.bf16.mxu0 0
        %880 = vmatpush2.bf16.msra.mxu0 0
        %881 = vmatprep.mubr.bf16.mxu0 0
        %882 = vmatmul.mubr.bf16.gmra.mxu0 %v770
        %v883 = vpop.f32.mrf.mxu0
        %v884 = vadd.f32 %v799, %v883
        %v885 = vpop.f32.mrf.mxu0
        %v886 = vpop.f32.mrf.mxu0
        %v887 = vadd.f32 %v799, %v886
        %v888 = vpop.f32.mrf.mxu0
        %889 = vmatprep.mubr.bf16.mxu0 0
        %890 = vmatmul.mubr.bf16.gmra.mxu0 %v771
        %v891 = vpop.f32.mrf.mxu0
        %v892 = vadd.f32 %v799, %v891
        %v893 = vpop.f32.mrf.mxu0
        %v894 = vpop.f32.mrf.mxu0
        %v895 = vadd.f32 %v799, %v894
        %v896 = vpop.f32.mrf.mxu0
        %897 = vmatprep.mubr.bf16.mxu0 0
        %898 = vmatmul.mubr.bf16.gmra.mxu0 %v772
        %v899 = vpop.f32.mrf.mxu0
        %v900 = vadd.f32 %v799, %v899
        %v901 = vpop.f32.mrf.mxu0
        %v902 = vpop.f32.mrf.mxu0
        %v903 = vadd.f32 %v799, %v902
        %v904 = vpop.f32.mrf.mxu0
        %905 = vmatprep.mubr.bf16.mxu0 0
        %906 = vmatmul.mubr.bf16.gmra.mxu0 %v773
        %v907 = vpop.f32.mrf.mxu0
        %v908 = vadd.f32 %v799, %v907
        %v909 = vpop.f32.mrf.mxu0
        %v910 = vpop.f32.mrf.mxu0
        %v911 = vadd.f32 %v799, %v910
        %v912 = vpop.f32.mrf.mxu0
        %913 = vmatprep.mubr.bf16.mxu0 0
        %914 = vmatmul.mubr.bf16.gmra.mxu0 %v774
        %v915 = vpop.f32.mrf.mxu0
        %v916 = vadd.f32 %v799, %v915
        %v917 = vpop.f32.mrf.mxu0
        %v918 = vpop.f32.mrf.mxu0
        %v919 = vadd.f32 %v799, %v918
        %v920 = vpop.f32.mrf.mxu0
        %921 = vmatprep.mubr.bf16.mxu0 0
        %922 = vmatmul.mubr.bf16.gmra.mxu0 %v775
        %v923 = vpop.f32.mrf.mxu0
        %v924 = vadd.f32 %v799, %v923
        %v925 = vpop.f32.mrf.mxu0
        %v926 = vpop.f32.mrf.mxu0
        %v927 = vadd.f32 %v799, %v926
        %v928 = vpop.f32.mrf.mxu0
        %929 = vmatprep.mubr.bf16.mxu0 0
        %930 = vmatmul.mubr.bf16.gmra.mxu0 %v776
        %v931 = vpop.f32.mrf.mxu0
        %v932 = vadd.f32 %v799, %v931
        %v933 = vpop.f32.mrf.mxu0
        %v934 = vpop.f32.mrf.mxu0
        %v935 = vadd.f32 %v799, %v934
        %v936 = vpop.f32.mrf.mxu0
        %937 = vmatprep.mubr.bf16.mxu0 0
        %938 = vmatmul.mubr.bf16.gmra.mxu0 %v777
        %v939 = vpop.f32.mrf.mxu0
        %v940 = vadd.f32 %v799, %v939
        %v941 = vpop.f32.mrf.mxu0
        %v942 = vpop.f32.mrf.mxu0
        %v943 = vadd.f32 %v799, %v942
        %v944 = vpop.f32.mrf.mxu0
        %945 = vdwg.mxu0
        %v946 = vmax.f32 %v884, 0.0
        %v947 = vmax.f32 %v887, 0.0
        %v948 = vmax.f32 %v892, 0.0
        %v949 = vmax.f32 %v895, 0.0
        %v950 = vmax.f32 %v900, 0.0
        %v951 = vmax.f32 %v903, 0.0
        %v952 = vmax.f32 %v908, 0.0
        %v953 = vmax.f32 %v911, 0.0
        %v954 = vmax.f32 %v916, 0.0
        %v955 = vmax.f32 %v919, 0.0
        %v956 = vmax.f32 %v924, 0.0
        %v957 = vmax.f32 %v927, 0.0
        %v958 = vmax.f32 %v932, 0.0
        %v959 = vmax.f32 %v935, 0.0
        %v960 = vmax.f32 %v940, 0.0
        %v961 = vmax.f32 %v943, 0.0
        %v962 = vpack.c.bf16 %v947, %v946
        %v963 = vpack.c.bf16 %v949, %v948
        %v964 = vpack.c.bf16 %v951, %v950
        %v965 = vpack.c.bf16 %v953, %v952
        %v966 = vpack.c.bf16 %v955, %v954
        %v967 = vpack.c.bf16 %v957, %v956
        %v968 = vpack.c.bf16 %v959, %v958
        %v969 = vpack.c.bf16 %v961, %v960
        %v970 = vld [vmem:[%s4] sm:$0xf]
        %v971 = vld [vmem:[%s4 + $0x4] sm:$0xf]
        %v972 = vld [vmem:[%s4 + $0x8] sm:$0xf]
        %v973 = vld [vmem:[%s4 + $0xc] sm:$0xf]
        %v974 = vld [vmem:[%s4 + $0x10] sm:$0xf]
        %v975 = vld [vmem:[%s4 + $0x14] sm:$0xf]
        %v976 = vld [vmem:[%s4 + $0x18] sm:$0xf]
        %v977 = vld [vmem:[%s4 + $0x1c] sm:$0xf]
        %v978 = vld [vmem:[%s4 + $0x20] sm:$0xf]
        %v979 = vld [vmem:[%s4 + $0x24] sm:$0xf]
        %v980 = vld [vmem:[%s4 + $0x28] sm:$0xf]
        %v981 = vld [vmem:[%s4 + $0x2c] sm:$0xf]
        %v982 = vld [vmem:[%s4 + $0x30] sm:$0xf]
        %v983 = vld [vmem:[%s4 + $0x34] sm:$0xf]
        %v984 = vld [vmem:[%s4 + $0x38] sm:$0xf]
        %v985 = vld [vmem:[%s4 + $0x3c] sm:$0xf]
        %v986 = vld [vmem:[%s5] sm:$0x1]
        %v988 = vlaneseq
        %v989 = vshrl.u32 %v988, 7
        %v990 = vsub.s32 0, %v989
        %v991 = vrot.slane %v986, %v990
        %v1009 = vunpack.c.l.b16 %v970
        %v1010 = vunpack.c.l.b16 %v971
        %v1011 = vunpack.c.l.b16 %v972
        %v1012 = vunpack.c.l.b16 %v973
        %v1013 = vunpack.c.l.b16 %v974
        %v1014 = vunpack.c.l.b16 %v975
        %v1015 = vunpack.c.l.b16 %v976
        %v1016 = vunpack.c.l.b16 %v977
        %v1017 = vunpack.c.l.b16 %v978
        %v1018 = vunpack.c.l.b16 %v979
        %v1019 = vunpack.c.l.b16 %v980
        %v1020 = vunpack.c.l.b16 %v981
        %v1021 = vunpack.c.l.b16 %v982
        %v1022 = vunpack.c.l.b16 %v983
        %v1023 = vunpack.c.l.b16 %v984
        %v1024 = vunpack.c.l.b16 %v985
        %v1025 = vpack.c.b16 %v1010, %v1009
        %v1026 = vpack.c.b16 %v1012, %v1011
        %v1027 = vpack.c.b16 %v1014, %v1013
        %v1028 = vpack.c.b16 %v1016, %v1015
        %v1029 = vpack.c.b16 %v1018, %v1017
        %v1030 = vpack.c.b16 %v1020, %v1019
        %v1031 = vpack.c.b16 %v1022, %v1021
        %v1032 = vpack.c.b16 %v1024, %v1023
        %1041 = vmatprep.subr.bf16.mxu0 0
        %1042 = vmatpush1.bf16.msra.mxu0 %v1032
        %1043 = vmatprep.subr.bf16.mxu0 0
        %1044 = vmatpush1.bf16.msra.mxu0 %v1031
        %1045 = vmatprep.subr.bf16.mxu0 0
        %1046 = vmatpush1.bf16.msra.mxu0 %v1030
        %1047 = vmatprep.subr.bf16.mxu0 0
        %1048 = vmatpush1.bf16.msra.mxu0 %v1029
        %1049 = vmatprep.subr.bf16.mxu0 0
        %1050 = vmatpush1.bf16.msra.mxu0 %v1028
        %1051 = vmatprep.subr.bf16.mxu0 0
        %1052 = vmatpush1.bf16.msra.mxu0 %v1027
        %1053 = vmatprep.subr.bf16.mxu0 0
        %1054 = vmatpush1.bf16.msra.mxu0 %v1026
        %1055 = vmatprep.subr.bf16.mxu0 0
        %1056 = vmatpush1.bf16.msra.mxu0 %v1025
        %1057 = vmatprep.subr.bf16.mxu0 0
        %1058 = vmatpush2.bf16.msra.mxu0 0
        %1059 = vmatprep.subr.bf16.mxu0 0
        %1060 = vmatpush2.bf16.msra.mxu0 0
        %1061 = vmatprep.subr.bf16.mxu0 0
        %1062 = vmatpush2.bf16.msra.mxu0 0
        %1063 = vmatprep.subr.bf16.mxu0 0
        %1064 = vmatpush2.bf16.msra.mxu0 0
        %1065 = vmatprep.subr.bf16.mxu0 0
        %1066 = vmatpush2.bf16.msra.mxu0 0
        %1067 = vmatprep.subr.bf16.mxu0 0
        %1068 = vmatpush2.bf16.msra.mxu0 0
        %1069 = vmatprep.subr.bf16.mxu0 0
        %1070 = vmatpush2.bf16.msra.mxu0 0
        %1071 = vmatprep.subr.bf16.mxu0 0
        %1072 = vmatpush2.bf16.msra.mxu0 0
        %1073 = vmatprep.mubr.bf16.mxu0 0
        %1074 = vmatmul.mubr.bf16.gmra.mxu0 %v962
        %v1075 = vpop.f32.mrf.mxu0
        %v1076 = vadd.f32 %v991, %v1075
        %v1077 = vpop.f32.mrf.mxu0
        %v1078 = vpop.f32.mrf.mxu0
        %v1079 = vadd.f32 %v991, %v1078
        %v1080 = vpop.f32.mrf.mxu0
        %1081 = vmatprep.mubr.bf16.mxu0 0
        %1082 = vmatmul.mubr.bf16.gmra.mxu0 %v963
        %v1083 = vpop.f32.mrf.mxu0
        %v1084 = vadd.f32 %v991, %v1083
        %v1085 = vpop.f32.mrf.mxu0
        %v1086 = vpop.f32.mrf.mxu0
        %v1087 = vadd.f32 %v991, %v1086
        %v1088 = vpop.f32.mrf.mxu0
        %1089 = vmatprep.mubr.bf16.mxu0 0
        %1090 = vmatmul.mubr.bf16.gmra.mxu0 %v964
        %v1091 = vpop.f32.mrf.mxu0
        %v1092 = vadd.f32 %v991, %v1091
        %v1093 = vpop.f32.mrf.mxu0
        %v1094 = vpop.f32.mrf.mxu0
        %v1095 = vadd.f32 %v991, %v1094
        %v1096 = vpop.f32.mrf.mxu0
        %1097 = vmatprep.mubr.bf16.mxu0 0
        %1098 = vmatmul.mubr.bf16.gmra.mxu0 %v965
        %v1099 = vpop.f32.mrf.mxu0
        %v1100 = vadd.f32 %v991, %v1099
        %v1101 = vpop.f32.mrf.mxu0
        %v1102 = vpop.f32.mrf.mxu0
        %v1103 = vadd.f32 %v991, %v1102
        %v1104 = vpop.f32.mrf.mxu0
        %1105 = vmatprep.mubr.bf16.mxu0 0
        %1106 = vmatmul.mubr.bf16.gmra.mxu0 %v966
        %v1107 = vpop.f32.mrf.mxu0
        %v1108 = vadd.f32 %v991, %v1107
        %v1109 = vpop.f32.mrf.mxu0
        %v1110 = vpop.f32.mrf.mxu0
        %v1111 = vadd.f32 %v991, %v1110
        %v1112 = vpop.f32.mrf.mxu0
        %1113 = vmatprep.mubr.bf16.mxu0 0
        %1114 = vmatmul.mubr.bf16.gmra.mxu0 %v967
        %v1115 = vpop.f32.mrf.mxu0
        %v1116 = vadd.f32 %v991, %v1115
        %v1117 = vpop.f32.mrf.mxu0
        %v1118 = vpop.f32.mrf.mxu0
        %v1119 = vadd.f32 %v991, %v1118
        %v1120 = vpop.f32.mrf.mxu0
        %1121 = vmatprep.mubr.bf16.mxu0 0
        %1122 = vmatmul.mubr.bf16.gmra.mxu0 %v968
        %v1123 = vpop.f32.mrf.mxu0
        %v1124 = vadd.f32 %v991, %v1123
        %v1125 = vpop.f32.mrf.mxu0
        %v1126 = vpop.f32.mrf.mxu0
        %v1127 = vadd.f32 %v991, %v1126
        %v1128 = vpop.f32.mrf.mxu0
        %1129 = vmatprep.mubr.bf16.mxu0 0
        %1130 = vmatmul.mubr.bf16.gmra.mxu0 %v969
        %v1131 = vpop.f32.mrf.mxu0
        %v1132 = vadd.f32 %v991, %v1131
        %v1133 = vpop.f32.mrf.mxu0
        %v1134 = vpop.f32.mrf.mxu0
        %v1135 = vadd.f32 %v991, %v1134
        %v1136 = vpop.f32.mrf.mxu0
        %1137 = vdwg.mxu0
        %v1138 = vld [vmem:[%s6] sm:$0x1]
        %v1140 = vlaneseq
        %v1141 = vshrl.u32 %v1140, 7
        %v1142 = vsub.s32 0, %v1141
        %v1143 = vrot.slane %v1138, %v1142
        %v1145 = vmul.f32 %v1076, %v1143
        %v1146 = vmul.f32 %v1079, %v1143
        %v1147 = vmul.f32 %v1084, %v1143
        %v1148 = vmul.f32 %v1087, %v1143
        %v1149 = vmul.f32 %v1092, %v1143
        %v1150 = vmul.f32 %v1095, %v1143
        %v1151 = vmul.f32 %v1100, %v1143
        %v1152 = vmul.f32 %v1103, %v1143
        %v1153 = vmul.f32 %v1108, %v1143
        %v1154 = vmul.f32 %v1111, %v1143
        %v1155 = vmul.f32 %v1116, %v1143
        %v1156 = vmul.f32 %v1119, %v1143
        %v1157 = vmul.f32 %v1124, %v1143
        %v1158 = vmul.f32 %v1127, %v1143
        %v1159 = vmul.f32 %v1132, %v1143
        %v1160 = vmul.f32 %v1135, %v1143
        %v1161 = vld [vmem:[%s7] sm:$0x1]
        %v1163 = vlaneseq
        %v1164 = vshrl.u32 %v1163, 7
        %v1165 = vsub.s32 0, %v1164
        %v1166 = vrot.slane %v1161, %v1165
        %v1168 = vadd.f32 %v1145, %v1166
        %v1169 = vadd.f32 %v1146, %v1166
        %v1170 = vadd.f32 %v1147, %v1166
        %v1171 = vadd.f32 %v1148, %v1166
        %v1172 = vadd.f32 %v1149, %v1166
        %v1173 = vadd.f32 %v1150, %v1166
        %v1174 = vadd.f32 %v1151, %v1166
        %v1175 = vadd.f32 %v1152, %v1166
        %v1176 = vadd.f32 %v1153, %v1166
        %v1177 = vadd.f32 %v1154, %v1166
        %v1178 = vadd.f32 %v1155, %v1166
        %v1179 = vadd.f32 %v1156, %v1166
        %v1180 = vadd.f32 %v1157, %v1166
        %v1181 = vadd.f32 %v1158, %v1166
        %v1182 = vadd.f32 %v1159, %v1166
        %v1183 = vadd.f32 %v1160, %v1166
        %v1184 = vmax.f32 %v1168, 0.0
        %v1185 = vmax.f32 %v1169, 0.0
        %v1186 = vmax.f32 %v1170, 0.0
        %v1187 = vmax.f32 %v1171, 0.0
        %v1188 = vmax.f32 %v1172, 0.0
        %v1189 = vmax.f32 %v1173, 0.0
        %v1190 = vmax.f32 %v1174, 0.0
        %v1191 = vmax.f32 %v1175, 0.0
        %v1192 = vmax.f32 %v1176, 0.0
        %v1193 = vmax.f32 %v1177, 0.0
        %v1194 = vmax.f32 %v1178, 0.0
        %v1195 = vmax.f32 %v1179, 0.0
        %v1196 = vmax.f32 %v1180, 0.0
        %v1197 = vmax.f32 %v1181, 0.0
        %v1198 = vmax.f32 %v1182, 0.0
        %v1199 = vmax.f32 %v1183, 0.0
        %v1200 = vpack.c.bf16 %v1185, %v1184
        %v1201 = vpack.c.bf16 %v1187, %v1186
        %v1202 = vpack.c.bf16 %v1189, %v1188
        %v1203 = vpack.c.bf16 %v1191, %v1190
        %v1204 = vpack.c.bf16 %v1193, %v1192
        %v1205 = vpack.c.bf16 %v1195, %v1194
        %v1206 = vpack.c.bf16 %v1197, %v1196
        %v1207 = vpack.c.bf16 %v1199, %v1198
        %v1216 = vunpack.c.l.b16 %v1200
        %v1217 = vunpack.c.h.b16 %v1200
        %v1218 = vunpack.c.l.b16 %v1201
        %v1219 = vunpack.c.h.b16 %v1201
        %v1220 = vunpack.c.l.b16 %v1202
        %v1221 = vunpack.c.h.b16 %v1202
        %v1222 = vunpack.c.l.b16 %v1203
        %v1223 = vunpack.c.h.b16 %v1203
        %v1224 = vunpack.c.l.b16 %v1204
        %v1225 = vunpack.c.h.b16 %v1204
        %v1226 = vunpack.c.l.b16 %v1205
        %v1227 = vunpack.c.h.b16 %v1205
        %v1228 = vunpack.c.l.b16 %v1206
        %v1229 = vunpack.c.h.b16 %v1206
        %v1230 = vunpack.c.l.b16 %v1207
        %v1231 = vunpack.c.h.b16 %v1207
        %v1232 = vpack.c.b16 %v1216, %v1216
        %v1233 = vpack.c.b16 %v1217, %v1217
        %v1234 = vpack.c.b16 %v1218, %v1218
        %v1235 = vpack.c.b16 %v1219, %v1219
        %v1236 = vpack.c.b16 %v1220, %v1220
        %v1237 = vpack.c.b16 %v1221, %v1221
        %v1238 = vpack.c.b16 %v1222, %v1222
        %v1239 = vpack.c.b16 %v1223, %v1223
        %v1240 = vpack.c.b16 %v1224, %v1224
        %v1241 = vpack.c.b16 %v1225, %v1225
        %v1242 = vpack.c.b16 %v1226, %v1226
        %v1243 = vpack.c.b16 %v1227, %v1227
        %v1244 = vpack.c.b16 %v1228, %v1228
        %v1245 = vpack.c.b16 %v1229, %v1229
        %v1246 = vpack.c.b16 %v1230, %v1230
        %v1247 = vpack.c.b16 %v1231, %v1231
        %1264 = vst [vmem:[%s338] sm:$0xf] %v1232
        %1265 = vst [vmem:[%s338 + $0x4] sm:$0xf] %v1233
        %1266 = vst [vmem:[%s338 + $0x8] sm:$0xf] %v1234
        %1267 = vst [vmem:[%s338 + $0xc] sm:$0xf] %v1235
        %1268 = vst [vmem:[%s338 + $0x10] sm:$0xf] %v1236
        %1269 = vst [vmem:[%s338 + $0x14] sm:$0xf] %v1237
        %1270 = vst [vmem:[%s338 + $0x18] sm:$0xf] %v1238
        %1271 = vst [vmem:[%s338 + $0x1c] sm:$0xf] %v1239
        %1272 = vst [vmem:[%s338 + $0x20] sm:$0xf] %v1240
        %1273 = vst [vmem:[%s338 + $0x24] sm:$0xf] %v1241
        %1274 = vst [vmem:[%s338 + $0x28] sm:$0xf] %v1242
        %1275 = vst [vmem:[%s338 + $0x2c] sm:$0xf] %v1243
        %1276 = vst [vmem:[%s338 + $0x30] sm:$0xf] %v1244
        %1277 = vst [vmem:[%s338 + $0x34] sm:$0xf] %v1245
        %1278 = vst [vmem:[%s338 + $0x38] sm:$0xf] %v1246
        %1279 = vst [vmem:[%s338 + $0x3c] sm:$0xf] %v1247
      $region60: #{gnn_lp_forward.3} parent=51 // pred_fallthru
        _
      %s1280 = smul.u32 16, %s23
      %p1281 = scmp.lt.s32.totalorder %s1280, 31
      %s1282 = scalar_select %p1281, %s1280, 31
      %s1283 = smul.addr %s1282, 4
      %s1284 = scalar_lea.vmem %s8, %s1283
      // Predicated region
      $region61: #{gnn_lp_forward.3} parent=51 // pred_check
        %p1285 = pneg %p224
      $region62: #{gnn_lp_forward.3} parent=51 // pred_check_branch
        %1287 = sbr.rel (%p1285) target = $region64
      $region63: #{gnn_lp_forward.3} parent=51 // pred_region
        %s1288 = smul.u32 16, %s23
      $region64: #{gnn_lp_forward.3} parent=51 // pred_fallthru
        _
    $region52: #{gnn_lp_forward.3} parent=5 // pred_fallthru
      _
    %p1289 = scmp.le.s32.totalorder 2, %s14
    // Predicated region
    $region65: #{gnn_lp_forward.3} parent=5 // pred_check
      %p1290 = pneg %p1289
    $region66: #{gnn_lp_forward.3} parent=5 // pred_check_branch
      %1292 = sbr.rel (%p1290) target = $region68
    $region67: #{gnn_lp_forward.3} parent=5 // pred_region
      %s1293 = ssub.s32 %s14, 2
      // Predicated region
      $region69: #{gnn_lp_forward.3} parent=67 // pred_check
        %p1294 = pneg %p230
      $region70: #{gnn_lp_forward.3} parent=67 // pred_check_branch
        %1296 = sbr.rel (%p1294) target = $region72
      $region71: #{gnn_lp_forward.3} parent=67 // pred_region
        %s1297 = smul.u32 16, %s25
        %p1298 = scmp.lt.s32.totalorder %s1297, 31
        %s1299 = scalar_select %p1298, %s1297, 31
        %s1300 = smul.addr %s1299, 4
        %s1301 = scalar_lea.vmem %s8, %s1300
      $region72: #{gnn_lp_forward.3} parent=67 // pred_fallthru
        _
    $region68: #{gnn_lp_forward.3} parent=5 // pred_fallthru
      _
  $region6: #{gnn_lp_forward.3} parent=0 // loop_footer
    %s18 = sadd.s32 1, %s14
  $region7: #{gnn_lp_forward.3} parent=0 // loop_footer_branch
    %13 = sbr.rel target = $region3
  $region8: #{gnn_lp_forward.3} parent=0 // loop_exit
    _

</llo_original>
